<compile_context>
chip_gen: v7x
topology: tpu7x:2x2x1
jax: 0.10.0
libtpu: 0.0.40
codegen_flags: <defaults>
</compile_context>

<pallas_src>
import math

import jax
import jax.numpy as jnp
from jax.experimental import pallas as pl
from jax.experimental.pallas import tpu as pltpu


# ---------------------------------------------------------------------------
# Kernel
# ---------------------------------------------------------------------------
def make_ext_encoder_kernel(L, D, H):
    dph = D // H

    def layernorm(v, g, b, eps=1e-6):
        mu = jnp.mean(v, axis=-1, keepdims=True)
        var = jnp.mean(jnp.square(v - mu), axis=-1, keepdims=True)
        return (v - mu) * jax.lax.rsqrt(var + eps) * g + b

    def gelu(v):  # PreSumm's tanh-approx gelu
        return 0.5 * v * (1.0 + jnp.tanh(math.sqrt(2.0 / math.pi) * (v + 0.044715 * v * v * v)))

    def kernel(top_ref, maskc_ref, maskr_ref, pe_ref,
               wqkv_ref, bqkv_ref, wo_ref, bo_ref,
               ln1g_ref, ln1b_ref, ffg_ref, ffb_ref,
               w1_ref, b1_ref, w2_ref, b2_ref,
               lnfg_ref, lnfb_ref, wow_ref, wob_ref,
               out_ref, x_ref):
        l = pl.program_id(1)
        last = pl.num_programs(1) - 1

        # ---- layer 0: build the embedding into the carried activation scratch ----
        @pl.when(l == 0)
        def _():
            x_ref[...] = top_ref[0] * maskc_ref[0] + pe_ref[...]

        x = x_ref[...]                                        # (L, D) fp32

        # pre-LayerNorm (skipped on layer 0, as in TransformerEncoderLayer)
        xn = jnp.where(l == 0, x, layernorm(x, ln1g_ref[0], ln1b_ref[0]))

        # ---- fused QKV projection (scale folded into Q host-side) ----
        qkv = jnp.dot(xn.astype(jnp.bfloat16), wqkv_ref[0],
                      preferred_element_type=jnp.float32) + bqkv_ref[0]   # (L, 3D) fp32

        def heads_of(off):                                    # (L, D) slice -> (H, L, dph)
            return jnp.stack(
                [qkv[:, off + h * dph: off + (h + 1) * dph] for h in range(H)], axis=0)

        qh = heads_of(0).astype(jnp.bfloat16)                 # already scaled by 1/sqrt(dph)
        kh = heads_of(D).astype(jnp.bfloat16)
        vh = heads_of(2 * D).astype(jnp.bfloat16)

        # ---- head-batched attention ----
        bias = jnp.where(maskr_ref[0] < 0.5,
                         jnp.float32(-1e18), jnp.float32(0.0))            # (1, L) key-pad bias
        s = jnp.einsum('hqd,hkd->hqk', qh, kh,
                       preferred_element_type=jnp.float32)                # (H, L, L)
        s = s + bias[None, :, :]
        s = s - jnp.max(s, axis=-1, keepdims=True)
        e = jnp.exp(s)
        attn = e * pl.reciprocal(jnp.sum(e, axis=-1, keepdims=True), approx=True)
        ctx = jnp.einsum('hqk,hkd->hqd', attn.astype(jnp.bfloat16), vh,
                         preferred_element_type=jnp.float32)              # (H, L, dph)
        ctx = jnp.concatenate([ctx[h] for h in range(H)], axis=-1)        # (L, D) lane-dense

        attn_out = jnp.dot(ctx.astype(jnp.bfloat16), wo_ref[0],
                           preferred_element_type=jnp.float32) + bo_ref[0]
        out = attn_out + x                                    # dropout == identity

        # ---- PositionwiseFeedForward: LN -> w1 -> gelu -> w2 -> + residual ----
        on = layernorm(out, ffg_ref[0], ffb_ref[0])
        inter = gelu(jnp.dot(on.astype(jnp.bfloat16), w1_ref[0],
                             preferred_element_type=jnp.float32) + b1_ref[0])
        ffn = jnp.dot(inter.astype(jnp.bfloat16), w2_ref[0],
                      preferred_element_type=jnp.float32) + b2_ref[0]
        x_new = ffn + out
        x_ref[...] = x_new

        # ---- final head: LayerNorm -> Linear(D, 1) -> sigmoid -> * mask ----
        @pl.when(l == last)
        def _():
            xf = layernorm(x_new, lnfg_ref[...], lnfb_ref[...])
            logits = jnp.dot(xf, wow_ref[...],
                             preferred_element_type=jnp.float32) + wob_ref[...]   # (L, 1)
            out_ref[0] = jax.nn.sigmoid(logits) * maskc_ref[0]

    return kernel


def ext_transformer_encoder(top_vecs, mask, params, heads):
    B, L, D = top_vecs.shape
    NL = params["wq"].shape[0]
    F = params["w1"].shape[-1]
    dph = D // heads
    scale = jnp.float32(1.0 / math.sqrt(dph))

    # Fuse Q/K/V into a single (D, 3D) projection; fold the 1/sqrt(dph) scale into Q.
    wqkv = jnp.concatenate(
        [params["wq"] * scale, params["wk"], params["wv"]], axis=-1)       # (NL, D, 3D)
    bqkv = jnp.concatenate(
        [params["bq"] * scale, params["bk"], params["bv"]], axis=-1)       # (NL, 3D)

    wdt = jnp.bfloat16
    mask_f = mask.astype(jnp.float32)

    inputs = [
        top_vecs.astype(jnp.float32),           # (B, L, D)
        mask_f[:, :, None],                     # (B, L, 1)  column layout
        mask_f[:, None, :],                     # (B, 1, L)  row layout (key-pad bias)
        params["pe"].astype(jnp.float32),       # (L, D)
        wqkv.astype(wdt),                       # (NL, D, 3D)
        bqkv[:, None, :].astype(jnp.float32),   # (NL, 1, 3D)
        params["wo"].astype(wdt),               # (NL, D, D)
        params["bo"][:, None, :],               # (NL, 1, D)
        params["ln1g"][:, None, :], params["ln1b"][:, None, :],
        params["ffg"][:, None, :], params["ffb"][:, None, :],
        params["w1"].astype(wdt), params["b1"][:, None, :],
        params["w2"].astype(wdt), params["b2"][:, None, :],
        params["lnfg"][None, :], params["lnfb"][None, :],
        params["wow"], params["wob"][None, :],
    ]

    def bspec(shape):   # per-batch block, indexed by grid axis 0
        return pl.BlockSpec((1,) + shape, lambda b, l: (b,) + (0,) * len(shape))

    def lspec(shape):   # per-layer weight block, indexed by grid axis 1 (double-buffered)
        return pl.BlockSpec((1,) + shape, lambda b, l: (l,) + (0,) * len(shape))

    def fspec(shape):   # full array, fetched once (constant block index)
        return pl.BlockSpec(shape, lambda b, l: (0,) * len(shape))

    in_specs = [
        bspec((L, D)),            # top
        bspec((L, 1)),            # mask column
        bspec((1, L)),            # mask row
        fspec((L, D)),            # pe
        lspec((D, 3 * D)),        # wqkv
        lspec((1, 3 * D)),        # bqkv
        lspec((D, D)),            # wo
        lspec((1, D)),            # bo
        lspec((1, D)), lspec((1, D)),   # ln1g, ln1b
        lspec((1, D)), lspec((1, D)),   # ffg, ffb
        lspec((D, F)), lspec((1, F)),   # w1, b1
        lspec((F, D)), lspec((1, D)),   # w2, b2
        fspec((1, D)), fspec((1, D)),   # lnfg, lnfb
        fspec((D, 1)), fspec((1, 1)),   # wow, wob
    ]

    kernel = make_ext_encoder_kernel(L, D, heads)

    out = pl.pallas_call(
        kernel,
        out_shape=jax.ShapeDtypeStruct((B, L, 1), jnp.float32),
        grid=(B, NL),
        in_specs=in_specs,
        out_specs=pl.BlockSpec((1, L, 1), lambda b, l: (b, 0, 0)),
        scratch_shapes=[pltpu.VMEM((L, D), jnp.float32)],
        compiler_params=pltpu.CompilerParams(
            dimension_semantics=("parallel", "arbitrary"),
            vmem_limit_bytes=48 * 1024 * 1024),
    )(*inputs)

    return out[:, :, 0]


# ---------------------------------------------------------------------------
# Deterministic parameter construction (shapes from the module's __init__)
# ---------------------------------------------------------------------------
def positional_encoding(L, D):
    position = jnp.arange(L, dtype=jnp.float32)[:, None]
    div_term = jnp.exp(jnp.arange(0, D, 2, dtype=jnp.float32) * -(math.log(10000.0) / D))
    pe = jnp.zeros((L, D), jnp.float32)
    pe = pe.at[:, 0::2].set(jnp.sin(position * div_term))
    pe = pe.at[:, 1::2].set(jnp.cos(position * div_term))
    return pe


def init_params(key, D, F, H, NL, L):
    ks = jax.random.split(key, 11)

    def w(k, shape, s=0.05):
        return (s * jax.random.normal(k, shape)).astype(jnp.float32)

    return dict(
        pe=positional_encoding(L, D),
        wq=w(ks[0], (NL, D, D)), bq=w(ks[1], (NL, D), 0.01),
        wk=w(ks[2], (NL, D, D)), bk=w(ks[3], (NL, D), 0.01),
        wv=w(ks[4], (NL, D, D)), bv=w(ks[5], (NL, D), 0.01),
        wo=w(ks[6], (NL, D, D)), bo=jnp.zeros((NL, D), jnp.float32),
        ln1g=jnp.ones((NL, D), jnp.float32), ln1b=jnp.zeros((NL, D), jnp.float32),
        ffg=jnp.ones((NL, D), jnp.float32), ffb=jnp.zeros((NL, D), jnp.float32),
        w1=w(ks[7], (NL, D, F)), b1=w(ks[8], (NL, F), 0.01),
        w2=w(ks[9], (NL, F, D)), b2=jnp.zeros((NL, D), jnp.float32),
        lnfg=jnp.ones((D,), jnp.float32), lnfb=jnp.zeros((D,), jnp.float32),
        wow=w(ks[10], (D, 1)), wob=jnp.zeros((1,), jnp.float32),
    )


# ---------------------------------------------------------------------------
# Pure-JAX fp32 reference (mirrors the PyTorch forward) for correctness checking
# ---------------------------------------------------------------------------
def reference(top_vecs, mask_bool, p, H):
    B, L, D = top_vecs.shape
    NL = p["wq"].shape[0]
    dph = D // H
    m = mask_bool.astype(jnp.float32)
    pad = ~mask_bool

    def ln(v, g, b):
        mu = v.mean(-1, keepdims=True)
        var = ((v - mu) ** 2).mean(-1, keepdims=True)
        return (v - mu) / jnp.sqrt(var + 1e-6) * g + b

    def gelu(v):
        return 0.5 * v * (1.0 + jnp.tanh(math.sqrt(2.0 / math.pi) * (v + 0.044715 * v ** 3)))

    x = top_vecs * m[:, :, None] + p["pe"][None]
    for l in range(NL):
        xn = x if l == 0 else ln(x, p["ln1g"][l], p["ln1b"][l])
        q = (xn @ p["wq"][l] + p["bq"][l]).reshape(B, L, H, dph).transpose(0, 2, 1, 3) / math.sqrt(dph)
        k = (xn @ p["wk"][l] + p["bk"][l]).reshape(B, L, H, dph).transpose(0, 2, 1, 3)
        v = (xn @ p["wv"][l] + p["bv"][l]).reshape(B, L, H, dph).transpose(0, 2, 1, 3)
        s = q @ jnp.swapaxes(k, -1, -2)
        s = jnp.where(pad[:, None, None, :], -1e18, s)
        a = jax.nn.softmax(s, axis=-1)
        ctx = (a @ v).transpose(0, 2, 1, 3).reshape(B, L, D)
        out = ctx @ p["wo"][l] + p["bo"][l] + x
        on = ln(out, p["ffg"][l], p["ffb"][l])
        inter = gelu(on @ p["w1"][l] + p["b1"][l])
        x = inter @ p["w2"][l] + p["b2"][l] + out
    xf = ln(x, p["lnfg"], p["lnfb"])
    return jax.nn.sigmoid(xf @ p["wow"] + p["wob"])[..., 0] * m


# ---------------------------------------------------------------------------
if __name__ == "__main__":
    B, L, D, H, F, NL = 2, 8, 32, 4, 64, 2   # batch, n_sents, d_model, heads, d_ff, layers

    key = jax.random.PRNGKey(0)
    k_top, k_par = jax.random.split(key)
    top_vecs = jax.random.normal(k_top, (B, L, D), dtype=jnp.float32)
    # mask: True = real sentence, False = padding
    mask = jnp.array([[1, 1, 1, 1, 1, 1, 1, 1],
                      [1, 1, 1, 1, 1, 1, 0, 0]], dtype=bool)

    params = init_params(k_par, D, F, H, NL, L)

    out = ext_transformer_encoder(top_vecs, mask, params, H)
    out = jax.block_until_ready(out)

    ref = reference(top_vecs, mask, params, H)
    assert out.shape == (B, L)
    # bf16 matmul operands (fp32 accumulation) -> loosened tolerance vs fp32 reference.
    assert jnp.allclose(out, ref, atol=2e-2, rtol=2e-2), (out, ref)

    print("KERNEL_OK")
</pallas_src>

<mosaic_0001>
module attributes {stable_mosaic.version = 11 : i64} {
  func.func @kernel(%arg0: i32, %arg1: i32, %arg2: memref<1x8x32xf32, #tpu.memory_space<vmem>>, %arg3: memref<1x8x1xf32, #tpu.memory_space<vmem>>, %arg4: memref<1x1x8xf32, #tpu.memory_space<vmem>>, %arg5: memref<8x32xf32, #tpu.memory_space<vmem>>, %arg6: memref<1x32x96xbf16, #tpu.memory_space<vmem>>, %arg7: memref<1x1x96xf32, #tpu.memory_space<vmem>>, %arg8: memref<1x32x32xbf16, #tpu.memory_space<vmem>>, %arg9: memref<1x1x32xf32, #tpu.memory_space<vmem>>, %arg10: memref<1x1x32xf32, #tpu.memory_space<vmem>>, %arg11: memref<1x1x32xf32, #tpu.memory_space<vmem>>, %arg12: memref<1x1x32xf32, #tpu.memory_space<vmem>>, %arg13: memref<1x1x32xf32, #tpu.memory_space<vmem>>, %arg14: memref<1x32x64xbf16, #tpu.memory_space<vmem>>, %arg15: memref<1x1x64xf32, #tpu.memory_space<vmem>>, %arg16: memref<1x64x32xbf16, #tpu.memory_space<vmem>>, %arg17: memref<1x1x32xf32, #tpu.memory_space<vmem>>, %arg18: memref<1x32xf32, #tpu.memory_space<vmem>>, %arg19: memref<1x32xf32, #tpu.memory_space<vmem>>, %arg20: memref<32x1xf32, #tpu.memory_space<vmem>>, %arg21: memref<1x1xf32, #tpu.memory_space<vmem>>, %arg22: memref<1x8x1xf32, #tpu.memory_space<vmem>>, %arg23: memref<8x32xf32, #tpu.memory_space<vmem>>) attributes {dimension_semantics = [#tpu.dimension_semantics<parallel>, #tpu.dimension_semantics<arbitrary>], iteration_bounds = array<i64: 2, 2>, scalar_prefetch = 0 : i64, scratch_operands = 1 : i64, tpu.core_type = #tpu.core_type<tc>, window_params = [{transform_indices = @transform_0, window_bounds = array<i64: 1, 8, 32>}, {transform_indices = @transform_1, window_bounds = array<i64: 1, 8, 1>}, {transform_indices = @transform_2, window_bounds = array<i64: 1, 1, 8>}, {pipeline_mode = #tpu.pipeline_mode<synchronous>, transform_indices = @transform_3, window_bounds = array<i64: 8, 32>}, {transform_indices = @transform_4, window_bounds = array<i64: 1, 32, 96>}, {transform_indices = @transform_5, window_bounds = array<i64: 1, 1, 96>}, {transform_indices = @transform_6, window_bounds = array<i64: 1, 32, 32>}, {transform_indices = @transform_7, window_bounds = array<i64: 1, 1, 32>}, {transform_indices = @transform_8, window_bounds = array<i64: 1, 1, 32>}, {transform_indices = @transform_9, window_bounds = array<i64: 1, 1, 32>}, {transform_indices = @transform_10, window_bounds = array<i64: 1, 1, 32>}, {transform_indices = @transform_11, window_bounds = array<i64: 1, 1, 32>}, {transform_indices = @transform_12, window_bounds = array<i64: 1, 32, 64>}, {transform_indices = @transform_13, window_bounds = array<i64: 1, 1, 64>}, {transform_indices = @transform_14, window_bounds = array<i64: 1, 64, 32>}, {transform_indices = @transform_15, window_bounds = array<i64: 1, 1, 32>}, {pipeline_mode = #tpu.pipeline_mode<synchronous>, transform_indices = @transform_16, window_bounds = array<i64: 1, 32>}, {pipeline_mode = #tpu.pipeline_mode<synchronous>, transform_indices = @transform_17, window_bounds = array<i64: 1, 32>}, {pipeline_mode = #tpu.pipeline_mode<synchronous>, transform_indices = @transform_18, window_bounds = array<i64: 32, 1>}, {pipeline_mode = #tpu.pipeline_mode<synchronous>, transform_indices = @transform_19, window_bounds = array<i64: 1, 1>}, {transform_indices = @transform_20, window_bounds = array<i64: 1, 8, 1>}]} {
    %c0_i32 = arith.constant 0 : i32
    %0 = arith.cmpi eq, %arg1, %c0_i32 : i32
    %1 = arith.extui %0 : i1 to i32
    %c0_i32_0 = arith.constant 0 : i32
    %2 = arith.cmpi ne, %1, %c0_i32_0 : i32
    scf.if %2 {
      %c0_69 = arith.constant 0 : index
      %c0_70 = arith.constant 0 : index
      %c0_71 = arith.constant 0 : index
      %171 = vector.load %arg2[%c0_69, %c0_70, %c0_71] : memref<1x8x32xf32, #tpu.memory_space<vmem>>, vector<1x8x32xf32>
      %172 = vector.shape_cast %171 : vector<1x8x32xf32> to vector<8x32xf32>
      %c0_72 = arith.constant 0 : index
      %c0_73 = arith.constant 0 : index
      %c0_74 = arith.constant 0 : index
      %173 = vector.load %arg3[%c0_72, %c0_73, %c0_74] : memref<1x8x1xf32, #tpu.memory_space<vmem>>, vector<1x8x1xf32>
      %174 = vector.shape_cast %173 : vector<1x8x1xf32> to vector<8x1xf32>
      %175 = vector.broadcast %174 : vector<8x1xf32> to vector<8x32xf32>
      %176 = arith.mulf %172, %175 : vector<8x32xf32>
      %c0_75 = arith.constant 0 : index
      %c0_76 = arith.constant 0 : index
      %177 = vector.load %arg5[%c0_75, %c0_76] : memref<8x32xf32, #tpu.memory_space<vmem>>, vector<8x32xf32>
      %178 = arith.addf %176, %177 : vector<8x32xf32>
      %c0_77 = arith.constant 0 : index
      %c0_78 = arith.constant 0 : index
      %179 = vector.load %arg23[%c0_77, %c0_78] : memref<8x32xf32, #tpu.memory_space<vmem>>, vector<8x32xf32>
      tpu.vector_store %arg23[%c0_77, %c0_78], %178 {strides = array<i32>} : memref<8x32xf32, #tpu.memory_space<vmem>>, vector<8x32xf32>,
    } else {
    }
    %c0 = arith.constant 0 : index
    %c0_1 = arith.constant 0 : index
    %3 = vector.load %arg23[%c0, %c0_1] : memref<8x32xf32, #tpu.memory_space<vmem>>, vector<8x32xf32>
    %c0_i32_2 = arith.constant 0 : i32
    %4 = arith.cmpi eq, %arg1, %c0_i32_2 : i32
    %c0_3 = arith.constant 0 : index
    %c0_4 = arith.constant 0 : index
    %c0_5 = arith.constant 0 : index
    %5 = vector.load %arg10[%c0_3, %c0_4, %c0_5] : memref<1x1x32xf32, #tpu.memory_space<vmem>>, vector<1x1x32xf32>
    %6 = vector.shape_cast %5 : vector<1x1x32xf32> to vector<1x32xf32>
    %c0_6 = arith.constant 0 : index
    %c0_7 = arith.constant 0 : index
    %c0_8 = arith.constant 0 : index
    %7 = vector.load %arg11[%c0_6, %c0_7, %c0_8] : memref<1x1x32xf32, #tpu.memory_space<vmem>>, vector<1x1x32xf32>
    %8 = vector.shape_cast %7 : vector<1x1x32xf32> to vector<1x32xf32>
    %cst = arith.constant dense<0.000000e+00> : vector<8xf32>
    %9 = vector.multi_reduction <add>, %3, %cst [1] : vector<8x32xf32> to vector<8xf32>
    %10 = vector.shape_cast %9 : vector<8xf32> to vector<8x1xf32>
    %cst_9 = arith.constant 3.200000e+01 : f32
    %11 = vector.broadcast %cst_9 : f32 to vector<8x1xf32>
    %12 = arith.divf %10, %11 : vector<8x1xf32>
    %13 = vector.broadcast %12 : vector<8x1xf32> to vector<8x32xf32>
    %14 = arith.subf %3, %13 : vector<8x32xf32>
    %15 = arith.mulf %14, %14 : vector<8x32xf32>
    %cst_10 = arith.constant dense<0.000000e+00> : vector<8xf32>
    %16 = vector.multi_reduction <add>, %15, %cst_10 [1] : vector<8x32xf32> to vector<8xf32>
    %17 = vector.shape_cast %16 : vector<8xf32> to vector<8x1xf32>
    %cst_11 = arith.constant 3.200000e+01 : f32
    %18 = vector.broadcast %cst_11 : f32 to vector<8x1xf32>
    %19 = arith.divf %17, %18 : vector<8x1xf32>
    %20 = vector.broadcast %12 : vector<8x1xf32> to vector<8x32xf32>
    %21 = arith.subf %3, %20 : vector<8x32xf32>
    %cst_12 = arith.constant 9.99999997E-7 : f32
    %22 = vector.broadcast %cst_12 : f32 to vector<8x1xf32>
    %23 = arith.addf %19, %22 : vector<8x1xf32>
    %24 = math.rsqrt %23 : vector<8x1xf32>
    %25 = vector.broadcast %24 : vector<8x1xf32> to vector<8x32xf32>
    %26 = arith.mulf %21, %25 : vector<8x32xf32>
    %27 = vector.broadcast %6 : vector<1x32xf32> to vector<8x32xf32>
    %28 = arith.mulf %26, %27 : vector<8x32xf32>
    %29 = vector.broadcast %8 : vector<1x32xf32> to vector<8x32xf32>
    %30 = arith.addf %28, %29 : vector<8x32xf32>
    %31 = arith.select %4, %3, %30 : vector<8x32xf32>
    %32 = arith.truncf %31 : vector<8x32xf32> to vector<8x32xbf16>
    %c0_13 = arith.constant 0 : index
    %c0_14 = arith.constant 0 : index
    %c0_15 = arith.constant 0 : index
    %33 = vector.load %arg6[%c0_13, %c0_14, %c0_15] : memref<1x32x96xbf16, #tpu.memory_space<vmem>>, vector<1x32x96xbf16>
    %34 = vector.shape_cast %33 : vector<1x32x96xbf16> to vector<32x96xbf16>
    %cst_16 = arith.constant dense<0.000000e+00> : vector<8x96xf32>
    %35 = tpu.matmul %32, %34, %cst_16 {dimension_numbers = #tpu.dot_dimension_numbers<[1], [0], [0], [1], [0, 0, 1, 1], [], []>} : vector<8x32xbf16>, vector<32x96xbf16>, vector<8x96xf32> -> vector<8x96xf32>
    %c0_17 = arith.constant 0 : index
    %c0_18 = arith.constant 0 : index
    %c0_19 = arith.constant 0 : index
    %36 = vector.load %arg7[%c0_17, %c0_18, %c0_19] : memref<1x1x96xf32, #tpu.memory_space<vmem>>, vector<1x1x96xf32>
    %37 = vector.shape_cast %36 : vector<1x1x96xf32> to vector<1x96xf32>
    %38 = vector.broadcast %37 : vector<1x96xf32> to vector<8x96xf32>
    %39 = arith.addf %35, %38 : vector<8x96xf32>
    %40 = vector.extract_strided_slice %39 {offsets = [0, 0], sizes = [8, 8], strides = [1, 1]} : vector<8x96xf32> to vector<8x8xf32>
    %41 = vector.extract_strided_slice %39 {offsets = [0, 8], sizes = [8, 8], strides = [1, 1]} : vector<8x96xf32> to vector<8x8xf32>
    %42 = vector.extract_strided_slice %39 {offsets = [0, 16], sizes = [8, 8], strides = [1, 1]} : vector<8x96xf32> to vector<8x8xf32>
    %43 = vector.extract_strided_slice %39 {offsets = [0, 24], sizes = [8, 8], strides = [1, 1]} : vector<8x96xf32> to vector<8x8xf32>
    %44 = vector.shape_cast %40 : vector<8x8xf32> to vector<1x8x8xf32>
    %45 = vector.shape_cast %41 : vector<8x8xf32> to vector<1x8x8xf32>
    %46 = vector.shape_cast %42 : vector<8x8xf32> to vector<1x8x8xf32>
    %47 = vector.shape_cast %43 : vector<8x8xf32> to vector<1x8x8xf32>
    %48 = tpu.concatenate %44, %45, %46, %47 in 0 : vector<1x8x8xf32>, vector<1x8x8xf32>, vector<1x8x8xf32>, vector<1x8x8xf32> -> vector<4x8x8xf32>
    %49 = arith.truncf %48 : vector<4x8x8xf32> to vector<4x8x8xbf16>
    %50 = vector.extract_strided_slice %39 {offsets = [0, 32], sizes = [8, 8], strides = [1, 1]} : vector<8x96xf32> to vector<8x8xf32>
    %51 = vector.extract_strided_slice %39 {offsets = [0, 40], sizes = [8, 8], strides = [1, 1]} : vector<8x96xf32> to vector<8x8xf32>
    %52 = vector.extract_strided_slice %39 {offsets = [0, 48], sizes = [8, 8], strides = [1, 1]} : vector<8x96xf32> to vector<8x8xf32>
    %53 = vector.extract_strided_slice %39 {offsets = [0, 56], sizes = [8, 8], strides = [1, 1]} : vector<8x96xf32> to vector<8x8xf32>
    %54 = vector.shape_cast %50 : vector<8x8xf32> to vector<1x8x8xf32>
    %55 = vector.shape_cast %51 : vector<8x8xf32> to vector<1x8x8xf32>
    %56 = vector.shape_cast %52 : vector<8x8xf32> to vector<1x8x8xf32>
    %57 = vector.shape_cast %53 : vector<8x8xf32> to vector<1x8x8xf32>
    %58 = tpu.concatenate %54, %55, %56, %57 in 0 : vector<1x8x8xf32>, vector<1x8x8xf32>, vector<1x8x8xf32>, vector<1x8x8xf32> -> vector<4x8x8xf32>
    %59 = arith.truncf %58 : vector<4x8x8xf32> to vector<4x8x8xbf16>
    %60 = vector.extract_strided_slice %39 {offsets = [0, 64], sizes = [8, 8], strides = [1, 1]} : vector<8x96xf32> to vector<8x8xf32>
    %61 = vector.extract_strided_slice %39 {offsets = [0, 72], sizes = [8, 8], strides = [1, 1]} : vector<8x96xf32> to vector<8x8xf32>
    %62 = vector.extract_strided_slice %39 {offsets = [0, 80], sizes = [8, 8], strides = [1, 1]} : vector<8x96xf32> to vector<8x8xf32>
    %63 = vector.extract_strided_slice %39 {offsets = [0, 88], sizes = [8, 8], strides = [1, 1]} : vector<8x96xf32> to vector<8x8xf32>
    %64 = vector.shape_cast %60 : vector<8x8xf32> to vector<1x8x8xf32>
    %65 = vector.shape_cast %61 : vector<8x8xf32> to vector<1x8x8xf32>
    %66 = vector.shape_cast %62 : vector<8x8xf32> to vector<1x8x8xf32>
    %67 = vector.shape_cast %63 : vector<8x8xf32> to vector<1x8x8xf32>
    %68 = tpu.concatenate %64, %65, %66, %67 in 0 : vector<1x8x8xf32>, vector<1x8x8xf32>, vector<1x8x8xf32>, vector<1x8x8xf32> -> vector<4x8x8xf32>
    %69 = arith.truncf %68 : vector<4x8x8xf32> to vector<4x8x8xbf16>
    %c0_20 = arith.constant 0 : index
    %c0_21 = arith.constant 0 : index
    %c0_22 = arith.constant 0 : index
    %70 = vector.load %arg4[%c0_20, %c0_21, %c0_22] : memref<1x1x8xf32, #tpu.memory_space<vmem>>, vector<1x1x8xf32>
    %71 = vector.shape_cast %70 : vector<1x1x8xf32> to vector<1x8xf32>
    %cst_23 = arith.constant 5.000000e-01 : f32
    %72 = vector.broadcast %cst_23 : f32 to vector<1x8xf32>
    %73 = arith.cmpf olt, %71, %72 : vector<1x8xf32>
    %cst_24 = arith.constant -9.99999984E+17 : f32
    %cst_25 = arith.constant 0.000000e+00 : f32
    %74 = vector.broadcast %cst_24 : f32 to vector<1x8xf32>
    %75 = vector.broadcast %cst_25 : f32 to vector<1x8xf32>
    %76 = arith.select %73, %74, %75 : vector<1x8xi1>, vector<1x8xf32>
    "tpu.trace_start"() <{level = 10 : i32, message = "hqd,hkd->hqk"}> : () -> ()
    %cst_26 = arith.constant dense<0.000000e+00> : vector<4x8x8xf32>
    %77 = tpu.matmul %49, %59, %cst_26 {dimension_numbers = #tpu.dot_dimension_numbers<[2], [2], [1], [1], [0, 0, 0, 1, 1, 1], [0], [0]>} : vector<4x8x8xbf16>, vector<4x8x8xbf16>, vector<4x8x8xf32> -> vector<4x8x8xf32>
    "tpu.trace_stop"() : () -> ()
    %78 = vector.shape_cast %76 : vector<1x8xf32> to vector<1x1x8xf32>
    %79 = vector.broadcast %78 : vector<1x1x8xf32> to vector<4x8x8xf32>
    %80 = arith.addf %77, %79 : vector<4x8x8xf32>
    %cst_27 = arith.constant dense<0xFF800000> : vector<4x8xf32>
    %81 = vector.multi_reduction <maximumf>, %80, %cst_27 [2] : vector<4x8x8xf32> to vector<4x8xf32>
    %82 = vector.shape_cast %81 : vector<4x8xf32> to vector<4x8x1xf32>
    %83 = vector.broadcast %82 : vector<4x8x1xf32> to vector<4x8x8xf32>
    %84 = arith.subf %80, %83 : vector<4x8x8xf32>
    %85 = math.exp %84 : vector<4x8x8xf32>
    %cst_28 = arith.constant dense<0.000000e+00> : vector<4x8xf32>
    %86 = vector.multi_reduction <add>, %85, %cst_28 [2] : vector<4x8x8xf32> to vector<4x8xf32>
    %87 = vector.shape_cast %86 : vector<4x8xf32> to vector<4x8x1xf32>
    %88 = tpu.reciprocal %87 {approx = true} : vector<4x8x1xf32> -> vector<4x8x1xf32>
    %89 = vector.broadcast %88 : vector<4x8x1xf32> to vector<4x8x8xf32>
    %90 = arith.mulf %85, %89 : vector<4x8x8xf32>
    %91 = arith.truncf %90 : vector<4x8x8xf32> to vector<4x8x8xbf16>
    "tpu.trace_start"() <{level = 10 : i32, message = "hqk,hkd->hqd"}> : () -> ()
    %cst_29 = arith.constant dense<0.000000e+00> : vector<4x8x8xf32>
    %92 = tpu.matmul %91, %69, %cst_29 {dimension_numbers = #tpu.dot_dimension_numbers<[2], [1], [1], [2], [0, 0, 0, 1, 1, 2], [0], [0]>} : vector<4x8x8xbf16>, vector<4x8x8xbf16>, vector<4x8x8xf32> -> vector<4x8x8xf32>
    "tpu.trace_stop"() : () -> ()
    %93 = vector.extract_strided_slice %92 {offsets = [0, 0, 0], sizes = [1, 8, 8], strides = [1, 1, 1]} : vector<4x8x8xf32> to vector<1x8x8xf32>
    %94 = vector.shape_cast %93 : vector<1x8x8xf32> to vector<8x8xf32>
    %95 = vector.extract_strided_slice %92 {offsets = [1, 0, 0], sizes = [1, 8, 8], strides = [1, 1, 1]} : vector<4x8x8xf32> to vector<1x8x8xf32>
    %96 = vector.shape_cast %95 : vector<1x8x8xf32> to vector<8x8xf32>
    %97 = vector.extract_strided_slice %92 {offsets = [2, 0, 0], sizes = [1, 8, 8], strides = [1, 1, 1]} : vector<4x8x8xf32> to vector<1x8x8xf32>
    %98 = vector.shape_cast %97 : vector<1x8x8xf32> to vector<8x8xf32>
    %99 = vector.extract_strided_slice %92 {offsets = [3, 0, 0], sizes = [1, 8, 8], strides = [1, 1, 1]} : vector<4x8x8xf32> to vector<1x8x8xf32>
    %100 = vector.shape_cast %99 : vector<1x8x8xf32> to vector<8x8xf32>
    %101 = tpu.concatenate %94, %96, %98, %100 in 1 : vector<8x8xf32>, vector<8x8xf32>, vector<8x8xf32>, vector<8x8xf32> -> vector<8x32xf32>
    %102 = arith.truncf %101 : vector<8x32xf32> to vector<8x32xbf16>
    %c0_30 = arith.constant 0 : index
    %c0_31 = arith.constant 0 : index
    %c0_32 = arith.constant 0 : index
    %103 = vector.load %arg8[%c0_30, %c0_31, %c0_32] : memref<1x32x32xbf16, #tpu.memory_space<vmem>>, vector<1x32x32xbf16>
    %104 = vector.shape_cast %103 : vector<1x32x32xbf16> to vector<32x32xbf16>
    %cst_33 = arith.constant dense<0.000000e+00> : vector<8x32xf32>
    %105 = tpu.matmul %102, %104, %cst_33 {dimension_numbers = #tpu.dot_dimension_numbers<[1], [0], [0], [1], [0, 0, 1, 1], [], []>} : vector<8x32xbf16>, vector<32x32xbf16>, vector<8x32xf32> -> vector<8x32xf32>
    %c0_34 = arith.constant 0 : index
    %c0_35 = arith.constant 0 : index
    %c0_36 = arith.constant 0 : index
    %106 = vector.load %arg9[%c0_34, %c0_35, %c0_36] : memref<1x1x32xf32, #tpu.memory_space<vmem>>, vector<1x1x32xf32>
    %107 = vector.shape_cast %106 : vector<1x1x32xf32> to vector<1x32xf32>
    %108 = vector.broadcast %107 : vector<1x32xf32> to vector<8x32xf32>
    %109 = arith.addf %105, %108 : vector<8x32xf32>
    %110 = arith.addf %109, %3 : vector<8x32xf32>
    %c0_37 = arith.constant 0 : index
    %c0_38 = arith.constant 0 : index
    %c0_39 = arith.constant 0 : index
    %111 = vector.load %arg12[%c0_37, %c0_38, %c0_39] : memref<1x1x32xf32, #tpu.memory_space<vmem>>, vector<1x1x32xf32>
    %112 = vector.shape_cast %111 : vector<1x1x32xf32> to vector<1x32xf32>
    %c0_40 = arith.constant 0 : index
    %c0_41 = arith.constant 0 : index
    %c0_42 = arith.constant 0 : index
    %113 = vector.load %arg13[%c0_40, %c0_41, %c0_42] : memref<1x1x32xf32, #tpu.memory_space<vmem>>, vector<1x1x32xf32>
    %114 = vector.shape_cast %113 : vector<1x1x32xf32> to vector<1x32xf32>
    %cst_43 = arith.constant dense<0.000000e+00> : vector<8xf32>
    %115 = vector.multi_reduction <add>, %110, %cst_43 [1] : vector<8x32xf32> to vector<8xf32>
    %116 = vector.shape_cast %115 : vector<8xf32> to vector<8x1xf32>
    %cst_44 = arith.constant 3.200000e+01 : f32
    %117 = vector.broadcast %cst_44 : f32 to vector<8x1xf32>
    %118 = arith.divf %116, %117 : vector<8x1xf32>
    %119 = vector.broadcast %118 : vector<8x1xf32> to vector<8x32xf32>
    %120 = arith.subf %110, %119 : vector<8x32xf32>
    %121 = arith.mulf %120, %120 : vector<8x32xf32>
    %cst_45 = arith.constant dense<0.000000e+00> : vector<8xf32>
    %122 = vector.multi_reduction <add>, %121, %cst_45 [1] : vector<8x32xf32> to vector<8xf32>
    %123 = vector.shape_cast %122 : vector<8xf32> to vector<8x1xf32>
    %cst_46 = arith.constant 3.200000e+01 : f32
    %124 = vector.broadcast %cst_46 : f32 to vector<8x1xf32>
    %125 = arith.divf %123, %124 : vector<8x1xf32>
    %126 = vector.broadcast %118 : vector<8x1xf32> to vector<8x32xf32>
    %127 = arith.subf %110, %126 : vector<8x32xf32>
    %cst_47 = arith.constant 9.99999997E-7 : f32
    %128 = vector.broadcast %cst_47 : f32 to vector<8x1xf32>
    %129 = arith.addf %125, %128 : vector<8x1xf32>
    %130 = math.rsqrt %129 : vector<8x1xf32>
    %131 = vector.broadcast %130 : vector<8x1xf32> to vector<8x32xf32>
    %132 = arith.mulf %127, %131 : vector<8x32xf32>
    %133 = vector.broadcast %112 : vector<1x32xf32> to vector<8x32xf32>
    %134 = arith.mulf %132, %133 : vector<8x32xf32>
    %135 = vector.broadcast %114 : vector<1x32xf32> to vector<8x32xf32>
    %136 = arith.addf %134, %135 : vector<8x32xf32>
    %137 = arith.truncf %136 : vector<8x32xf32> to vector<8x32xbf16>
    %c0_48 = arith.constant 0 : index
    %c0_49 = arith.constant 0 : index
    %c0_50 = arith.constant 0 : index
    %138 = vector.load %arg14[%c0_48, %c0_49, %c0_50] : memref<1x32x64xbf16, #tpu.memory_space<vmem>>, vector<1x32x64xbf16>
    %139 = vector.shape_cast %138 : vector<1x32x64xbf16> to vector<32x64xbf16>
    %cst_51 = arith.constant dense<0.000000e+00> : vector<8x64xf32>
    %140 = tpu.matmul %137, %139, %cst_51 {dimension_numbers = #tpu.dot_dimension_numbers<[1], [0], [0], [1], [0, 0, 1, 1], [], []>} : vector<8x32xbf16>, vector<32x64xbf16>, vector<8x64xf32> -> vector<8x64xf32>
    %c0_52 = arith.constant 0 : index
    %c0_53 = arith.constant 0 : index
    %c0_54 = arith.constant 0 : index
    %141 = vector.load %arg15[%c0_52, %c0_53, %c0_54] : memref<1x1x64xf32, #tpu.memory_space<vmem>>, vector<1x1x64xf32>
    %142 = vector.shape_cast %141 : vector<1x1x64xf32> to vector<1x64xf32>
    %143 = vector.broadcast %142 : vector<1x64xf32> to vector<8x64xf32>
    %144 = arith.addf %140, %143 : vector<8x64xf32>
    %cst_55 = arith.constant 5.000000e-01 : f32
    %145 = vector.broadcast %cst_55 : f32 to vector<8x64xf32>
    %146 = arith.mulf %145, %144 : vector<8x64xf32>
    %cst_56 = arith.constant 4.471500e-02 : f32
    %147 = vector.broadcast %cst_56 : f32 to vector<8x64xf32>
    %148 = arith.mulf %147, %144 : vector<8x64xf32>
    %149 = arith.mulf %148, %144 : vector<8x64xf32>
    %150 = arith.mulf %149, %144 : vector<8x64xf32>
    %151 = arith.addf %144, %150 : vector<8x64xf32>
    %cst_57 = arith.constant 0.797884583 : f32
    %152 = vector.broadcast %cst_57 : f32 to vector<8x64xf32>
    %153 = arith.mulf %152, %151 : vector<8x64xf32>
    %154 = math.tanh %153 : vector<8x64xf32>
    %cst_58 = arith.constant 1.000000e+00 : f32
    %155 = vector.broadcast %cst_58 : f32 to vector<8x64xf32>
    %156 = arith.addf %155, %154 : vector<8x64xf32>
    %157 = arith.mulf %146, %156 : vector<8x64xf32>
    %158 = arith.truncf %157 : vector<8x64xf32> to vector<8x64xbf16>
    %c0_59 = arith.constant 0 : index
    %c0_60 = arith.constant 0 : index
    %c0_61 = arith.constant 0 : index
    %159 = vector.load %arg16[%c0_59, %c0_60, %c0_61] : memref<1x64x32xbf16, #tpu.memory_space<vmem>>, vector<1x64x32xbf16>
    %160 = vector.shape_cast %159 : vector<1x64x32xbf16> to vector<64x32xbf16>
    %cst_62 = arith.constant dense<0.000000e+00> : vector<8x32xf32>
    %161 = tpu.matmul %158, %160, %cst_62 {dimension_numbers = #tpu.dot_dimension_numbers<[1], [0], [0], [1], [0, 0, 1, 1], [], []>} : vector<8x64xbf16>, vector<64x32xbf16>, vector<8x32xf32> -> vector<8x32xf32>
    %c0_63 = arith.constant 0 : index
    %c0_64 = arith.constant 0 : index
    %c0_65 = arith.constant 0 : index
    %162 = vector.load %arg17[%c0_63, %c0_64, %c0_65] : memref<1x1x32xf32, #tpu.memory_space<vmem>>, vector<1x1x32xf32>
    %163 = vector.shape_cast %162 : vector<1x1x32xf32> to vector<1x32xf32>
    %164 = vector.broadcast %163 : vector<1x32xf32> to vector<8x32xf32>
    %165 = arith.addf %161, %164 : vector<8x32xf32>
    %166 = arith.addf %165, %110 : vector<8x32xf32>
    %c0_66 = arith.constant 0 : index
    %c0_67 = arith.constant 0 : index
    %167 = vector.load %arg23[%c0_66, %c0_67] : memref<8x32xf32, #tpu.memory_space<vmem>>, vector<8x32xf32>
    tpu.vector_store %arg23[%c0_66, %c0_67], %166 {strides = array<i32>} : memref<8x32xf32, #tpu.memory_space<vmem>>, vector<8x32xf32>,
    %c1_i32 = arith.constant 1 : i32
    %168 = arith.cmpi eq, %arg1, %c1_i32 : i32
    %169 = arith.extui %168 : i1 to i32
    %c0_i32_68 = arith.constant 0 : i32
    %170 = arith.cmpi ne, %169, %c0_i32_68 : i32
    scf.if %170 {
      %c0_69 = arith.constant 0 : index
      %c0_70 = arith.constant 0 : index
      %171 = vector.load %arg18[%c0_69, %c0_70] : memref<1x32xf32, #tpu.memory_space<vmem>>, vector<1x32xf32>
      %c0_71 = arith.constant 0 : index
      %c0_72 = arith.constant 0 : index
      %172 = vector.load %arg19[%c0_71, %c0_72] : memref<1x32xf32, #tpu.memory_space<vmem>>, vector<1x32xf32>
      %cst_73 = arith.constant dense<0.000000e+00> : vector<8xf32>
      %173 = vector.multi_reduction <add>, %166, %cst_73 [1] : vector<8x32xf32> to vector<8xf32>
      %174 = vector.shape_cast %173 : vector<8xf32> to vector<8x1xf32>
      %cst_74 = arith.constant 3.200000e+01 : f32
      %175 = vector.broadcast %cst_74 : f32 to vector<8x1xf32>
      %176 = arith.divf %174, %175 : vector<8x1xf32>
      %177 = vector.broadcast %176 : vector<8x1xf32> to vector<8x32xf32>
      %178 = arith.subf %166, %177 : vector<8x32xf32>
      %179 = arith.mulf %178, %178 : vector<8x32xf32>
      %cst_75 = arith.constant dense<0.000000e+00> : vector<8xf32>
      %180 = vector.multi_reduction <add>, %179, %cst_75 [1] : vector<8x32xf32> to vector<8xf32>
      %181 = vector.shape_cast %180 : vector<8xf32> to vector<8x1xf32>
      %cst_76 = arith.constant 3.200000e+01 : f32
      %182 = vector.broadcast %cst_76 : f32 to vector<8x1xf32>
      %183 = arith.divf %181, %182 : vector<8x1xf32>
      %184 = vector.broadcast %176 : vector<8x1xf32> to vector<8x32xf32>
      %185 = arith.subf %166, %184 : vector<8x32xf32>
      %cst_77 = arith.constant 9.99999997E-7 : f32
      %186 = vector.broadcast %cst_77 : f32 to vector<8x1xf32>
      %187 = arith.addf %183, %186 : vector<8x1xf32>
      %188 = math.rsqrt %187 : vector<8x1xf32>
      %189 = vector.broadcast %188 : vector<8x1xf32> to vector<8x32xf32>
      %190 = arith.mulf %185, %189 : vector<8x32xf32>
      %191 = vector.broadcast %171 : vector<1x32xf32> to vector<8x32xf32>
      %192 = arith.mulf %190, %191 : vector<8x32xf32>
      %193 = vector.broadcast %172 : vector<1x32xf32> to vector<8x32xf32>
      %194 = arith.addf %192, %193 : vector<8x32xf32>
      %c0_78 = arith.constant 0 : index
      %c0_79 = arith.constant 0 : index
      %195 = vector.load %arg20[%c0_78, %c0_79] : memref<32x1xf32, #tpu.memory_space<vmem>>, vector<32x1xf32>
      %cst_80 = arith.constant dense<0.000000e+00> : vector<8x1xf32>
      %196 = tpu.matmul %194, %195, %cst_80 {dimension_numbers = #tpu.dot_dimension_numbers<[1], [0], [0], [1], [0, 0, 1, 1], [], []>} : vector<8x32xf32>, vector<32x1xf32>, vector<8x1xf32> -> vector<8x1xf32>
      %c0_81 = arith.constant 0 : index
      %c0_82 = arith.constant 0 : index
      %197 = vector.load %arg21[%c0_81, %c0_82] : memref<1x1xf32, #tpu.memory_space<vmem>>, vector<1x1xf32>
      %198 = vector.broadcast %197 : vector<1x1xf32> to vector<8x1xf32>
      %199 = arith.addf %196, %198 : vector<8x1xf32>
      %200 = arith.negf %199 : vector<8x1xf32>
      %201 = math.exp %200 : vector<8x1xf32>
      %cst_83 = arith.constant 1.000000e+00 : f32
      %202 = vector.broadcast %cst_83 : f32 to vector<8x1xf32>
      %203 = arith.addf %202, %201 : vector<8x1xf32>
      %204 = arith.divf %202, %203 : vector<8x1xf32>
      %c0_84 = arith.constant 0 : index
      %c0_85 = arith.constant 0 : index
      %c0_86 = arith.constant 0 : index
      %205 = vector.load %arg3[%c0_84, %c0_85, %c0_86] : memref<1x8x1xf32, #tpu.memory_space<vmem>>, vector<1x8x1xf32>
      %206 = vector.shape_cast %205 : vector<1x8x1xf32> to vector<8x1xf32>
      %207 = arith.mulf %204, %206 : vector<8x1xf32>
      %c0_87 = arith.constant 0 : index
      %c0_88 = arith.constant 0 : index
      %c0_89 = arith.constant 0 : index
      %208 = vector.load %arg22[%c0_87, %c0_88, %c0_89] : memref<1x8x1xf32, #tpu.memory_space<vmem>>, vector<1x8x1xf32>
      %209 = vector.shape_cast %208 : vector<1x8x1xf32> to vector<8x1xf32>
      %210 = vector.shape_cast %207 : vector<8x1xf32> to vector<1x8x1xf32>
      tpu.vector_store %arg22[%c0_87, %c0_88, %c0_89], %210 {strides = array<i32>} : memref<1x8x1xf32, #tpu.memory_space<vmem>>, vector<1x8x1xf32>,
    } else {
    }
    return
  }
  func.func @transform_0(%arg0: i32, %arg1: i32) -> (i32, i32, i32) {
    %c0_i32 = arith.constant 0 : i32
    %c0_i32_0 = arith.constant 0 : i32
    %c0_i32_1 = arith.constant 0 : i32
    return %arg0, %c0_i32, %c0_i32_0 : i32, i32, i32
  }
  func.func @transform_1(%arg0: i32, %arg1: i32) -> (i32, i32, i32) {
    %c0_i32 = arith.constant 0 : i32
    %c0_i32_0 = arith.constant 0 : i32
    %c0_i32_1 = arith.constant 0 : i32
    return %arg0, %c0_i32, %c0_i32_0 : i32, i32, i32
  }
  func.func @transform_2(%arg0: i32, %arg1: i32) -> (i32, i32, i32) {
    %c0_i32 = arith.constant 0 : i32
    %c0_i32_0 = arith.constant 0 : i32
    %c0_i32_1 = arith.constant 0 : i32
    return %arg0, %c0_i32, %c0_i32_0 : i32, i32, i32
  }
  func.func @transform_3(%arg0: i32, %arg1: i32) -> (i32, i32) {
    %c0_i32 = arith.constant 0 : i32
    %c0_i32_0 = arith.constant 0 : i32
    %c0_i32_1 = arith.constant 0 : i32
    return %c0_i32, %c0_i32_0 : i32, i32
  }
  func.func @transform_4(%arg0: i32, %arg1: i32) -> (i32, i32, i32) {
    %c0_i32 = arith.constant 0 : i32
    %c0_i32_0 = arith.constant 0 : i32
    %c0_i32_1 = arith.constant 0 : i32
    return %arg1, %c0_i32, %c0_i32_0 : i32, i32, i32
  }
  func.func @transform_5(%arg0: i32, %arg1: i32) -> (i32, i32, i32) {
    %c0_i32 = arith.constant 0 : i32
    %c0_i32_0 = arith.constant 0 : i32
    %c0_i32_1 = arith.constant 0 : i32
    return %arg1, %c0_i32, %c0_i32_0 : i32, i32, i32
  }
  func.func @transform_6(%arg0: i32, %arg1: i32) -> (i32, i32, i32) {
    %c0_i32 = arith.constant 0 : i32
    %c0_i32_0 = arith.constant 0 : i32
    %c0_i32_1 = arith.constant 0 : i32
    return %arg1, %c0_i32, %c0_i32_0 : i32, i32, i32
  }
  func.func @transform_7(%arg0: i32, %arg1: i32) -> (i32, i32, i32) {
    %c0_i32 = arith.constant 0 : i32
    %c0_i32_0 = arith.constant 0 : i32
    %c0_i32_1 = arith.constant 0 : i32
    return %arg1, %c0_i32, %c0_i32_0 : i32, i32, i32
  }
  func.func @transform_8(%arg0: i32, %arg1: i32) -> (i32, i32, i32) {
    %c0_i32 = arith.constant 0 : i32
    %c0_i32_0 = arith.constant 0 : i32
    %c0_i32_1 = arith.constant 0 : i32
    return %arg1, %c0_i32, %c0_i32_0 : i32, i32, i32
  }
  func.func @transform_9(%arg0: i32, %arg1: i32) -> (i32, i32, i32) {
    %c0_i32 = arith.constant 0 : i32
    %c0_i32_0 = arith.constant 0 : i32
    %c0_i32_1 = arith.constant 0 : i32
    return %arg1, %c0_i32, %c0_i32_0 : i32, i32, i32
  }
  func.func @transform_10(%arg0: i32, %arg1: i32) -> (i32, i32, i32) {
    %c0_i32 = arith.constant 0 : i32
    %c0_i32_0 = arith.constant 0 : i32
    %c0_i32_1 = arith.constant 0 : i32
    return %arg1, %c0_i32, %c0_i32_0 : i32, i32, i32
  }
  func.func @transform_11(%arg0: i32, %arg1: i32) -> (i32, i32, i32) {
    %c0_i32 = arith.constant 0 : i32
    %c0_i32_0 = arith.constant 0 : i32
    %c0_i32_1 = arith.constant 0 : i32
    return %arg1, %c0_i32, %c0_i32_0 : i32, i32, i32
  }
  func.func @transform_12(%arg0: i32, %arg1: i32) -> (i32, i32, i32) {
    %c0_i32 = arith.constant 0 : i32
    %c0_i32_0 = arith.constant 0 : i32
    %c0_i32_1 = arith.constant 0 : i32
    return %arg1, %c0_i32, %c0_i32_0 : i32, i32, i32
  }
  func.func @transform_13(%arg0: i32, %arg1: i32) -> (i32, i32, i32) {
    %c0_i32 = arith.constant 0 : i32
    %c0_i32_0 = arith.constant 0 : i32
    %c0_i32_1 = arith.constant 0 : i32
    return %arg1, %c0_i32, %c0_i32_0 : i32, i32, i32
  }
  func.func @transform_14(%arg0: i32, %arg1: i32) -> (i32, i32, i32) {
    %c0_i32 = arith.constant 0 : i32
    %c0_i32_0 = arith.constant 0 : i32
    %c0_i32_1 = arith.constant 0 : i32
    return %arg1, %c0_i32, %c0_i32_0 : i32, i32, i32
  }
  func.func @transform_15(%arg0: i32, %arg1: i32) -> (i32, i32, i32) {
    %c0_i32 = arith.constant 0 : i32
    %c0_i32_0 = arith.constant 0 : i32
    %c0_i32_1 = arith.constant 0 : i32
    return %arg1, %c0_i32, %c0_i32_0 : i32, i32, i32
  }
  func.func @transform_16(%arg0: i32, %arg1: i32) -> (i32, i32) {
    %c0_i32 = arith.constant 0 : i32
    %c0_i32_0 = arith.constant 0 : i32
    %c0_i32_1 = arith.constant 0 : i32
    return %c0_i32, %c0_i32_0 : i32, i32
  }
  func.func @transform_17(%arg0: i32, %arg1: i32) -> (i32, i32) {
    %c0_i32 = arith.constant 0 : i32
    %c0_i32_0 = arith.constant 0 : i32
    %c0_i32_1 = arith.constant 0 : i32
    return %c0_i32, %c0_i32_0 : i32, i32
  }
  func.func @transform_18(%arg0: i32, %arg1: i32) -> (i32, i32) {
    %c0_i32 = arith.constant 0 : i32
    %c0_i32_0 = arith.constant 0 : i32
    %c0_i32_1 = arith.constant 0 : i32
    return %c0_i32, %c0_i32_0 : i32, i32
  }
  func.func @transform_19(%arg0: i32, %arg1: i32) -> (i32, i32) {
    %c0_i32 = arith.constant 0 : i32
    %c0_i32_0 = arith.constant 0 : i32
    %c0_i32_1 = arith.constant 0 : i32
    return %c0_i32, %c0_i32_0 : i32, i32
  }
  func.func @transform_20(%arg0: i32, %arg1: i32) -> (i32, i32, i32) {
    %c0_i32 = arith.constant 0 : i32
    %c0_i32_0 = arith.constant 0 : i32
    %c0_i32_1 = arith.constant 0 : i32
    return %arg0, %c0_i32, %c0_i32_0 : i32, i32, i32
  }
}

</mosaic_0001>

<llo_original>
// kernel: tpu_custom_call.1
$region0: #{tpu_custom_call.1}
  #allocation0 [shape = 'u32[]', space=smem, size = 0x4, offset = 0x4, fixed_abs, tag = 'smem constant byte address 0x4 - core index']
  #allocation1 [shape = 'u32[144,128]{1,0:T(1,128)}', space=vmem, size = 0x12000, scoped, tag = 'internal scratch']
  #allocation2 [shape = 'f32[8,32]{1,0:T(8,128)}', space=vmem, size = 0x1000, scoped, tag = 'scratch operand']
  #allocation3 [shape = 'f32[1,1]{1,0:T(1,128)S(1)}', space=vmem, size = 0x200, scoped, tag = 'scoped memory for tpu_custom_call.1']
  %s0 = inlined_call_operand.vmem [shape: f32[2,8,32], index: 0, kind: input, shape index: {}]
  %s1 = inlined_call_operand.vmem [shape: f32[2,8,1], index: 1, kind: input, shape index: {}]
  %s2 = inlined_call_operand.vmem [shape: f32[2,1,8], index: 2, kind: input, shape index: {}]
  %s3 = inlined_call_operand.vmem [shape: f32[8,32], index: 3, kind: input, shape index: {}]
  %s4 = inlined_call_operand.vmem [shape: bf16[2,32,96], index: 4, kind: input, shape index: {}]
  %s5 = inlined_call_operand.vmem [shape: f32[2,1,96], index: 5, kind: input, shape index: {}]
  %s6 = inlined_call_operand.vmem [shape: bf16[2,32,32], index: 6, kind: input, shape index: {}]
  %s7 = inlined_call_operand.vmem [shape: f32[2,1,32], index: 7, kind: input, shape index: {}]
  %s8 = inlined_call_operand.vmem [shape: f32[2,1,32], index: 8, kind: input, shape index: {}]
  %s9 = inlined_call_operand.vmem [shape: f32[2,1,32], index: 9, kind: input, shape index: {}]
  %s10 = inlined_call_operand.vmem [shape: f32[2,1,32], index: 10, kind: input, shape index: {}]
  %s11 = inlined_call_operand.vmem [shape: f32[2,1,32], index: 11, kind: input, shape index: {}]
  %s12 = inlined_call_operand.vmem [shape: bf16[2,32,64], index: 12, kind: input, shape index: {}]
  %s13 = inlined_call_operand.vmem [shape: f32[2,1,64], index: 13, kind: input, shape index: {}]
  %s14 = inlined_call_operand.vmem [shape: bf16[2,64,32], index: 14, kind: input, shape index: {}]
  %s15 = inlined_call_operand.vmem [shape: f32[2,1,32], index: 15, kind: input, shape index: {}]
  %s16 = inlined_call_operand.vmem [shape: f32[1,32], index: 16, kind: input, shape index: {}]
  %s17 = inlined_call_operand.vmem [shape: f32[1,32], index: 17, kind: input, shape index: {}]
  %s18 = inlined_call_operand.vmem [shape: f32[32,1], index: 18, kind: input, shape index: {}]
  %s19 = inlined_call_operand.<no memory space> [shape: f32[1,1], index: 19, kind: input, shape index: {}]
  %s20 = inlined_call_operand.vmem [shape: f32[2,8,1], index: 20, kind: output, shape index: {}]
  %s21 = sld [smem:[#allocation0]]
  $region121: #{tpu_custom_call.1} parent=0
    _
  %s23 = ssub.s32 1, %s21
  %s24 = scalar_select 0, %s23, %s21
  %v25 = vstv %s19
  %26 = vst [vmem:[#allocation3] sm:$0x1] %v25
  loop: start=0, step=1, limit=6
  $region2: #{tpu_custom_call.1} parent=0 // loop_pre_header
    _
  $region3: #{tpu_custom_call.1} parent=0 // loop_header
    %s28 = sphi 0, %s32
    %p29 = scmp.ge.s32.totalorder %s28, 6
    %s35 = sphi 0, %s47
    %s36 = sphi 0, %s43
    %s37 = sphi 0, %s35
    %s38 = sphi 0, %s36
    %s39 = sphi 0, %s37
    %s40 = sphi 0, %s38
    %s50 = sphi 0, %s52
    %s53 = sphi 0, %s50
    %s54 = sphi 0, %s53
    %s70 = sphi 0, %s54
    %s76 = sphi 0, %s78
    %s79 = sphi 0, %s76
    %s80 = sphi 0, %s79
    %s96 = sphi 0, %s80
    %s102 = sphi 0, %s104
    %s105 = sphi 0, %s102
    %s106 = sphi 0, %s105
    %s122 = sphi 0, %s106
    %s126 = sphi 0, %s126
    %s128 = sphi 0, %s126
    %s129 = sphi 0, %s128
    %s143 = sphi 0, %s129
    %s149 = sphi 0, %s151
    %s152 = sphi 0, %s149
    %s153 = sphi 0, %s152
    %s169 = sphi 0, %s153
    %s175 = sphi 0, %s177
    %s178 = sphi 0, %s175
    %s179 = sphi 0, %s178
    %s195 = sphi 0, %s179
    %s201 = sphi 0, %s203
    %s204 = sphi 0, %s201
    %s205 = sphi 0, %s204
    %s221 = sphi 0, %s205
    %s227 = sphi 0, %s229
    %s230 = sphi 0, %s227
    %s231 = sphi 0, %s230
    %s247 = sphi 0, %s231
    %s253 = sphi 0, %s255
    %s256 = sphi 0, %s253
    %s257 = sphi 0, %s256
    %s273 = sphi 0, %s257
    %s279 = sphi 0, %s281
    %s282 = sphi 0, %s279
    %s283 = sphi 0, %s282
    %s299 = sphi 0, %s283
    %s305 = sphi 0, %s307
    %s308 = sphi 0, %s305
    %s309 = sphi 0, %s308
    %s325 = sphi 0, %s309
    %s331 = sphi 0, %s333
    %s334 = sphi 0, %s331
    %s335 = sphi 0, %s334
    %s351 = sphi 0, %s335
    %s357 = sphi 0, %s359
    %s360 = sphi 0, %s357
    %s361 = sphi 0, %s360
    %s377 = sphi 0, %s361
    %s383 = sphi 0, %s385
    %s386 = sphi 0, %s383
    %s387 = sphi 0, %s386
    %s403 = sphi 0, %s387
    %s409 = sphi 0, %s411
    %s412 = sphi 0, %s409
    %s413 = sphi 0, %s412
    %s429 = sphi 0, %s413
    %s435 = sphi 0, %s437
    %s438 = sphi 0, %s435
    %s439 = sphi 0, %s438
    %s455 = sphi 0, %s439
    %s459 = sphi 0, %s459
    %s461 = sphi 0, %s459
    %s462 = sphi 0, %s461
    %s476 = sphi 0, %s462
    %s480 = sphi 0, %s480
    %s482 = sphi 0, %s480
    %s483 = sphi 0, %s482
    %s497 = sphi 0, %s483
    %s501 = sphi 0, %s501
    %s503 = sphi 0, %s501
    %s504 = sphi 0, %s503
    %s518 = sphi 0, %s504
    %s522 = sphi 0, %s522
    %s524 = sphi 0, %s522
    %s525 = sphi 0, %s524
    %s539 = sphi 0, %s525
    %s545 = sphi 0, %s547
    %s548 = sphi 0, %s545
    %s549 = sphi 0, %s548
    %s565 = sphi 0, %s549
  $region4: #{tpu_custom_call.1} parent=0 // loop_header_branch
    %31 = sbr.rel (%p29) target = $region8
  $region5: #{tpu_custom_call.1} parent=0 // loop_body
    %s33 = ssub.s32 %s28, 1
    %s34 = ssub.s32 %s28, 2
    %s41 = sadd.s32 1, %s36
    %p42 = scmp.ge.s32.totalorder %s41, 2
    %s43 = scalar_select %p42, 0, %s41
    %s44 = sadd.s32 1, %s35
    %s45 = scalar_select %p42, %s44, %s35
    %p46 = scmp.ge.s32.totalorder %s45, 2
    %s47 = scalar_select %p46, 0, %s45
    %s48 = ssub.s32 %s35, %s47
    %p49 = scmp.eq.s32.totalorder %s48, 0
    %s51 = sadd.s32 %s50, 1
    %s52 = scalar_select %p49, %s50, %s51
    %p55 = pneg %p49
    %p56 = scmp.eq.s32.totalorder %s28, 3
    %p57 = por %p55, %p56
    %p58 = scmp.ne.s32.totalorder %s50, %s53
    %p59 = scmp.eq.s32.totalorder %s28, 0
    %p60 = por %p58, %p59
    %p61 = scmp.ne.s32.totalorder %s50, %s53
    %p62 = scmp.eq.s32.totalorder %s33, 3
    %p63 = por %p61, %p62
    %p64 = scmp.ne.s32.totalorder %s53, %s54
    %p65 = scmp.eq.s32.totalorder %s33, 0
    %p66 = por %p64, %p65
    %p67 = scmp.ne.s32.totalorder %s53, %s54
    %p68 = scmp.eq.s32.totalorder %s34, 3
    %p69 = por %p67, %p68
    %p71 = scmp.ne.s32.totalorder %s54, %s70
    %p72 = scmp.eq.s32.totalorder %s34, 0
    %p73 = por %p71, %p72
    %s74 = ssub.s32 %s35, %s47
    %p75 = scmp.eq.s32.totalorder %s74, 0
    %s77 = sadd.s32 %s76, 1
    %s78 = scalar_select %p75, %s76, %s77
    %p81 = pneg %p75
    %p82 = scmp.eq.s32.totalorder %s28, 3
    %p83 = por %p81, %p82
    %p84 = scmp.ne.s32.totalorder %s76, %s79
    %p85 = scmp.eq.s32.totalorder %s28, 0
    %p86 = por %p84, %p85
    %p87 = scmp.ne.s32.totalorder %s76, %s79
    %p88 = scmp.eq.s32.totalorder %s33, 3
    %p89 = por %p87, %p88
    %p90 = scmp.ne.s32.totalorder %s79, %s80
    %p91 = scmp.eq.s32.totalorder %s33, 0
    %p92 = por %p90, %p91
    %p93 = scmp.ne.s32.totalorder %s79, %s80
    %p94 = scmp.eq.s32.totalorder %s34, 3
    %p95 = por %p93, %p94
    %p97 = scmp.ne.s32.totalorder %s80, %s96
    %p98 = scmp.eq.s32.totalorder %s34, 0
    %p99 = por %p97, %p98
    %s100 = ssub.s32 %s35, %s47
    %p101 = scmp.eq.s32.totalorder %s100, 0
    %s103 = sadd.s32 %s102, 1
    %s104 = scalar_select %p101, %s102, %s103
    %p107 = pneg %p101
    %p108 = scmp.eq.s32.totalorder %s28, 3
    %p109 = por %p107, %p108
    %p110 = scmp.ne.s32.totalorder %s102, %s105
    %p111 = scmp.eq.s32.totalorder %s28, 0
    %p112 = por %p110, %p111
    %p113 = scmp.ne.s32.totalorder %s102, %s105
    %p114 = scmp.eq.s32.totalorder %s33, 3
    %p115 = por %p113, %p114
    %p116 = scmp.ne.s32.totalorder %s105, %s106
    %p117 = scmp.eq.s32.totalorder %s33, 0
    %p118 = por %p116, %p117
    %p119 = scmp.ne.s32.totalorder %s105, %s106
    %p120 = scmp.eq.s32.totalorder %s34, 3
    %p121 = por %p119, %p120
    %p123 = scmp.ne.s32.totalorder %s106, %s122
    %p124 = scmp.eq.s32.totalorder %s34, 0
    %p125 = por %p123, %p124
    %s127 = sadd.s32 %s126, 1
    %p130 = scmp.eq.s32.totalorder %s28, 3
    %p131 = scmp.ne.s32.totalorder %s126, %s128
    %p132 = scmp.eq.s32.totalorder %s28, 0
    %p133 = por %p131, %p132
    %p134 = scmp.ne.s32.totalorder %s126, %s128
    %p135 = scmp.eq.s32.totalorder %s33, 3
    %p136 = por %p134, %p135
    %p137 = scmp.ne.s32.totalorder %s128, %s129
    %p138 = scmp.eq.s32.totalorder %s33, 0
    %p139 = por %p137, %p138
    %p140 = scmp.ne.s32.totalorder %s128, %s129
    %p141 = scmp.eq.s32.totalorder %s34, 3
    %p142 = por %p140, %p141
    %p144 = scmp.ne.s32.totalorder %s129, %s143
    %p145 = scmp.eq.s32.totalorder %s34, 0
    %p146 = por %p144, %p145
    %s147 = ssub.s32 %s36, %s43
    %p148 = scmp.eq.s32.totalorder %s147, 0
    %s150 = sadd.s32 %s149, 1
    %s151 = scalar_select %p148, %s149, %s150
    %p154 = pneg %p148
    %p155 = scmp.eq.s32.totalorder %s28, 3
    %p156 = por %p154, %p155
    %p157 = scmp.ne.s32.totalorder %s149, %s152
    %p158 = scmp.eq.s32.totalorder %s28, 0
    %p159 = por %p157, %p158
    %p160 = scmp.ne.s32.totalorder %s149, %s152
    %p161 = scmp.eq.s32.totalorder %s33, 3
    %p162 = por %p160, %p161
    %p163 = scmp.ne.s32.totalorder %s152, %s153
    %p164 = scmp.eq.s32.totalorder %s33, 0
    %p165 = por %p163, %p164
    %p166 = scmp.ne.s32.totalorder %s152, %s153
    %p167 = scmp.eq.s32.totalorder %s34, 3
    %p168 = por %p166, %p167
    %p170 = scmp.ne.s32.totalorder %s153, %s169
    %p171 = scmp.eq.s32.totalorder %s34, 0
    %p172 = por %p170, %p171
    %s173 = ssub.s32 %s36, %s43
    %p174 = scmp.eq.s32.totalorder %s173, 0
    %s176 = sadd.s32 %s175, 1
    %s177 = scalar_select %p174, %s175, %s176
    %p180 = pneg %p174
    %p181 = scmp.eq.s32.totalorder %s28, 3
    %p182 = por %p180, %p181
    %p183 = scmp.ne.s32.totalorder %s175, %s178
    %p184 = scmp.eq.s32.totalorder %s28, 0
    %p185 = por %p183, %p184
    %p186 = scmp.ne.s32.totalorder %s175, %s178
    %p187 = scmp.eq.s32.totalorder %s33, 3
    %p188 = por %p186, %p187
    %p189 = scmp.ne.s32.totalorder %s178, %s179
    %p190 = scmp.eq.s32.totalorder %s33, 0
    %p191 = por %p189, %p190
    %p192 = scmp.ne.s32.totalorder %s178, %s179
    %p193 = scmp.eq.s32.totalorder %s34, 3
    %p194 = por %p192, %p193
    %p196 = scmp.ne.s32.totalorder %s179, %s195
    %p197 = scmp.eq.s32.totalorder %s34, 0
    %p198 = por %p196, %p197
    %s199 = ssub.s32 %s36, %s43
    %p200 = scmp.eq.s32.totalorder %s199, 0
    %s202 = sadd.s32 %s201, 1
    %s203 = scalar_select %p200, %s201, %s202
    %p206 = pneg %p200
    %p207 = scmp.eq.s32.totalorder %s28, 3
    %p208 = por %p206, %p207
    %p209 = scmp.ne.s32.totalorder %s201, %s204
    %p210 = scmp.eq.s32.totalorder %s28, 0
    %p211 = por %p209, %p210
    %p212 = scmp.ne.s32.totalorder %s201, %s204
    %p213 = scmp.eq.s32.totalorder %s33, 3
    %p214 = por %p212, %p213
    %p215 = scmp.ne.s32.totalorder %s204, %s205
    %p216 = scmp.eq.s32.totalorder %s33, 0
    %p217 = por %p215, %p216
    %p218 = scmp.ne.s32.totalorder %s204, %s205
    %p219 = scmp.eq.s32.totalorder %s34, 3
    %p220 = por %p218, %p219
    %p222 = scmp.ne.s32.totalorder %s205, %s221
    %p223 = scmp.eq.s32.totalorder %s34, 0
    %p224 = por %p222, %p223
    %s225 = ssub.s32 %s36, %s43
    %p226 = scmp.eq.s32.totalorder %s225, 0
    %s228 = sadd.s32 %s227, 1
    %s229 = scalar_select %p226, %s227, %s228
    %p232 = pneg %p226
    %p233 = scmp.eq.s32.totalorder %s28, 3
    %p234 = por %p232, %p233
    %p235 = scmp.ne.s32.totalorder %s227, %s230
    %p236 = scmp.eq.s32.totalorder %s28, 0
    %p237 = por %p235, %p236
    %p238 = scmp.ne.s32.totalorder %s227, %s230
    %p239 = scmp.eq.s32.totalorder %s33, 3
    %p240 = por %p238, %p239
    %p241 = scmp.ne.s32.totalorder %s230, %s231
    %p242 = scmp.eq.s32.totalorder %s33, 0
    %p243 = por %p241, %p242
    %p244 = scmp.ne.s32.totalorder %s230, %s231
    %p245 = scmp.eq.s32.totalorder %s34, 3
    %p246 = por %p244, %p245
    %p248 = scmp.ne.s32.totalorder %s231, %s247
    %p249 = scmp.eq.s32.totalorder %s34, 0
    %p250 = por %p248, %p249
    %s251 = ssub.s32 %s36, %s43
    %p252 = scmp.eq.s32.totalorder %s251, 0
    %s254 = sadd.s32 %s253, 1
    %s255 = scalar_select %p252, %s253, %s254
    %p258 = pneg %p252
    %p259 = scmp.eq.s32.totalorder %s28, 3
    %p260 = por %p258, %p259
    %p261 = scmp.ne.s32.totalorder %s253, %s256
    %p262 = scmp.eq.s32.totalorder %s28, 0
    %p263 = por %p261, %p262
    %p264 = scmp.ne.s32.totalorder %s253, %s256
    %p265 = scmp.eq.s32.totalorder %s33, 3
    %p266 = por %p264, %p265
    %p267 = scmp.ne.s32.totalorder %s256, %s257
    %p268 = scmp.eq.s32.totalorder %s33, 0
    %p269 = por %p267, %p268
    %p270 = scmp.ne.s32.totalorder %s256, %s257
    %p271 = scmp.eq.s32.totalorder %s34, 3
    %p272 = por %p270, %p271
    %p274 = scmp.ne.s32.totalorder %s257, %s273
    %p275 = scmp.eq.s32.totalorder %s34, 0
    %p276 = por %p274, %p275
    %s277 = ssub.s32 %s36, %s43
    %p278 = scmp.eq.s32.totalorder %s277, 0
    %s280 = sadd.s32 %s279, 1
    %s281 = scalar_select %p278, %s279, %s280
    %p284 = pneg %p278
    %p285 = scmp.eq.s32.totalorder %s28, 3
    %p286 = por %p284, %p285
    %p287 = scmp.ne.s32.totalorder %s279, %s282
    %p288 = scmp.eq.s32.totalorder %s28, 0
    %p289 = por %p287, %p288
    %p290 = scmp.ne.s32.totalorder %s279, %s282
    %p291 = scmp.eq.s32.totalorder %s33, 3
    %p292 = por %p290, %p291
    %p293 = scmp.ne.s32.totalorder %s282, %s283
    %p294 = scmp.eq.s32.totalorder %s33, 0
    %p295 = por %p293, %p294
    %p296 = scmp.ne.s32.totalorder %s282, %s283
    %p297 = scmp.eq.s32.totalorder %s34, 3
    %p298 = por %p296, %p297
    %p300 = scmp.ne.s32.totalorder %s283, %s299
    %p301 = scmp.eq.s32.totalorder %s34, 0
    %p302 = por %p300, %p301
    %s303 = ssub.s32 %s36, %s43
    %p304 = scmp.eq.s32.totalorder %s303, 0
    %s306 = sadd.s32 %s305, 1
    %s307 = scalar_select %p304, %s305, %s306
    %p310 = pneg %p304
    %p311 = scmp.eq.s32.totalorder %s28, 3
    %p312 = por %p310, %p311
    %p313 = scmp.ne.s32.totalorder %s305, %s308
    %p314 = scmp.eq.s32.totalorder %s28, 0
    %p315 = por %p313, %p314
    %p316 = scmp.ne.s32.totalorder %s305, %s308
    %p317 = scmp.eq.s32.totalorder %s33, 3
    %p318 = por %p316, %p317
    %p319 = scmp.ne.s32.totalorder %s308, %s309
    %p320 = scmp.eq.s32.totalorder %s33, 0
    %p321 = por %p319, %p320
    %p322 = scmp.ne.s32.totalorder %s308, %s309
    %p323 = scmp.eq.s32.totalorder %s34, 3
    %p324 = por %p322, %p323
    %p326 = scmp.ne.s32.totalorder %s309, %s325
    %p327 = scmp.eq.s32.totalorder %s34, 0
    %p328 = por %p326, %p327
    %s329 = ssub.s32 %s36, %s43
    %p330 = scmp.eq.s32.totalorder %s329, 0
    %s332 = sadd.s32 %s331, 1
    %s333 = scalar_select %p330, %s331, %s332
    %p336 = pneg %p330
    %p337 = scmp.eq.s32.totalorder %s28, 3
    %p338 = por %p336, %p337
    %p339 = scmp.ne.s32.totalorder %s331, %s334
    %p340 = scmp.eq.s32.totalorder %s28, 0
    %p341 = por %p339, %p340
    %p342 = scmp.ne.s32.totalorder %s331, %s334
    %p343 = scmp.eq.s32.totalorder %s33, 3
    %p344 = por %p342, %p343
    %p345 = scmp.ne.s32.totalorder %s334, %s335
    %p346 = scmp.eq.s32.totalorder %s33, 0
    %p347 = por %p345, %p346
    %p348 = scmp.ne.s32.totalorder %s334, %s335
    %p349 = scmp.eq.s32.totalorder %s34, 3
    %p350 = por %p348, %p349
    %p352 = scmp.ne.s32.totalorder %s335, %s351
    %p353 = scmp.eq.s32.totalorder %s34, 0
    %p354 = por %p352, %p353
    %s355 = ssub.s32 %s36, %s43
    %p356 = scmp.eq.s32.totalorder %s355, 0
    %s358 = sadd.s32 %s357, 1
    %s359 = scalar_select %p356, %s357, %s358
    %p362 = pneg %p356
    %p363 = scmp.eq.s32.totalorder %s28, 3
    %p364 = por %p362, %p363
    %p365 = scmp.ne.s32.totalorder %s357, %s360
    %p366 = scmp.eq.s32.totalorder %s28, 0
    %p367 = por %p365, %p366
    %p368 = scmp.ne.s32.totalorder %s357, %s360
    %p369 = scmp.eq.s32.totalorder %s33, 3
    %p370 = por %p368, %p369
    %p371 = scmp.ne.s32.totalorder %s360, %s361
    %p372 = scmp.eq.s32.totalorder %s33, 0
    %p373 = por %p371, %p372
    %p374 = scmp.ne.s32.totalorder %s360, %s361
    %p375 = scmp.eq.s32.totalorder %s34, 3
    %p376 = por %p374, %p375
    %p378 = scmp.ne.s32.totalorder %s361, %s377
    %p379 = scmp.eq.s32.totalorder %s34, 0
    %p380 = por %p378, %p379
    %s381 = ssub.s32 %s36, %s43
    %p382 = scmp.eq.s32.totalorder %s381, 0
    %s384 = sadd.s32 %s383, 1
    %s385 = scalar_select %p382, %s383, %s384
    %p388 = pneg %p382
    %p389 = scmp.eq.s32.totalorder %s28, 3
    %p390 = por %p388, %p389
    %p391 = scmp.ne.s32.totalorder %s383, %s386
    %p392 = scmp.eq.s32.totalorder %s28, 0
    %p393 = por %p391, %p392
    %p394 = scmp.ne.s32.totalorder %s383, %s386
    %p395 = scmp.eq.s32.totalorder %s33, 3
    %p396 = por %p394, %p395
    %p397 = scmp.ne.s32.totalorder %s386, %s387
    %p398 = scmp.eq.s32.totalorder %s33, 0
    %p399 = por %p397, %p398
    %p400 = scmp.ne.s32.totalorder %s386, %s387
    %p401 = scmp.eq.s32.totalorder %s34, 3
    %p402 = por %p400, %p401
    %p404 = scmp.ne.s32.totalorder %s387, %s403
    %p405 = scmp.eq.s32.totalorder %s34, 0
    %p406 = por %p404, %p405
    %s407 = ssub.s32 %s36, %s43
    %p408 = scmp.eq.s32.totalorder %s407, 0
    %s410 = sadd.s32 %s409, 1
    %s411 = scalar_select %p408, %s409, %s410
    %p414 = pneg %p408
    %p415 = scmp.eq.s32.totalorder %s28, 3
    %p416 = por %p414, %p415
    %p417 = scmp.ne.s32.totalorder %s409, %s412
    %p418 = scmp.eq.s32.totalorder %s28, 0
    %p419 = por %p417, %p418
    %p420 = scmp.ne.s32.totalorder %s409, %s412
    %p421 = scmp.eq.s32.totalorder %s33, 3
    %p422 = por %p420, %p421
    %p423 = scmp.ne.s32.totalorder %s412, %s413
    %p424 = scmp.eq.s32.totalorder %s33, 0
    %p425 = por %p423, %p424
    %p426 = scmp.ne.s32.totalorder %s412, %s413
    %p427 = scmp.eq.s32.totalorder %s34, 3
    %p428 = por %p426, %p427
    %p430 = scmp.ne.s32.totalorder %s413, %s429
    %p431 = scmp.eq.s32.totalorder %s34, 0
    %p432 = por %p430, %p431
    %s433 = ssub.s32 %s36, %s43
    %p434 = scmp.eq.s32.totalorder %s433, 0
    %s436 = sadd.s32 %s435, 1
    %s437 = scalar_select %p434, %s435, %s436
    %p440 = pneg %p434
    %p441 = scmp.eq.s32.totalorder %s28, 3
    %p442 = por %p440, %p441
    %p443 = scmp.ne.s32.totalorder %s435, %s438
    %p444 = scmp.eq.s32.totalorder %s28, 0
    %p445 = por %p443, %p444
    %p446 = scmp.ne.s32.totalorder %s435, %s438
    %p447 = scmp.eq.s32.totalorder %s33, 3
    %p448 = por %p446, %p447
    %p449 = scmp.ne.s32.totalorder %s438, %s439
    %p450 = scmp.eq.s32.totalorder %s33, 0
    %p451 = por %p449, %p450
    %p452 = scmp.ne.s32.totalorder %s438, %s439
    %p453 = scmp.eq.s32.totalorder %s34, 3
    %p454 = por %p452, %p453
    %p456 = scmp.ne.s32.totalorder %s439, %s455
    %p457 = scmp.eq.s32.totalorder %s34, 0
    %p458 = por %p456, %p457
    %s460 = sadd.s32 %s459, 1
    %p463 = scmp.eq.s32.totalorder %s28, 3
    %p464 = scmp.ne.s32.totalorder %s459, %s461
    %p465 = scmp.eq.s32.totalorder %s28, 0
    %p466 = por %p464, %p465
    %p467 = scmp.ne.s32.totalorder %s459, %s461
    %p468 = scmp.eq.s32.totalorder %s33, 3
    %p469 = por %p467, %p468
    %p470 = scmp.ne.s32.totalorder %s461, %s462
    %p471 = scmp.eq.s32.totalorder %s33, 0
    %p472 = por %p470, %p471
    %p473 = scmp.ne.s32.totalorder %s461, %s462
    %p474 = scmp.eq.s32.totalorder %s34, 3
    %p475 = por %p473, %p474
    %p477 = scmp.ne.s32.totalorder %s462, %s476
    %p478 = scmp.eq.s32.totalorder %s34, 0
    %p479 = por %p477, %p478
    %s481 = sadd.s32 %s480, 1
    %p484 = scmp.eq.s32.totalorder %s28, 3
    %p485 = scmp.ne.s32.totalorder %s480, %s482
    %p486 = scmp.eq.s32.totalorder %s28, 0
    %p487 = por %p485, %p486
    %p488 = scmp.ne.s32.totalorder %s480, %s482
    %p489 = scmp.eq.s32.totalorder %s33, 3
    %p490 = por %p488, %p489
    %p491 = scmp.ne.s32.totalorder %s482, %s483
    %p492 = scmp.eq.s32.totalorder %s33, 0
    %p493 = por %p491, %p492
    %p494 = scmp.ne.s32.totalorder %s482, %s483
    %p495 = scmp.eq.s32.totalorder %s34, 3
    %p496 = por %p494, %p495
    %p498 = scmp.ne.s32.totalorder %s483, %s497
    %p499 = scmp.eq.s32.totalorder %s34, 0
    %p500 = por %p498, %p499
    %s502 = sadd.s32 %s501, 1
    %p505 = scmp.eq.s32.totalorder %s28, 3
    %p506 = scmp.ne.s32.totalorder %s501, %s503
    %p507 = scmp.eq.s32.totalorder %s28, 0
    %p508 = por %p506, %p507
    %p509 = scmp.ne.s32.totalorder %s501, %s503
    %p510 = scmp.eq.s32.totalorder %s33, 3
    %p511 = por %p509, %p510
    %p512 = scmp.ne.s32.totalorder %s503, %s504
    %p513 = scmp.eq.s32.totalorder %s33, 0
    %p514 = por %p512, %p513
    %p515 = scmp.ne.s32.totalorder %s503, %s504
    %p516 = scmp.eq.s32.totalorder %s34, 3
    %p517 = por %p515, %p516
    %p519 = scmp.ne.s32.totalorder %s504, %s518
    %p520 = scmp.eq.s32.totalorder %s34, 0
    %p521 = por %p519, %p520
    %s523 = sadd.s32 %s522, 1
    %p526 = scmp.eq.s32.totalorder %s28, 3
    %p527 = scmp.ne.s32.totalorder %s522, %s524
    %p528 = scmp.eq.s32.totalorder %s28, 0
    %p529 = por %p527, %p528
    %p530 = scmp.ne.s32.totalorder %s522, %s524
    %p531 = scmp.eq.s32.totalorder %s33, 3
    %p532 = por %p530, %p531
    %p533 = scmp.ne.s32.totalorder %s524, %s525
    %p534 = scmp.eq.s32.totalorder %s33, 0
    %p535 = por %p533, %p534
    %p536 = scmp.ne.s32.totalorder %s524, %s525
    %p537 = scmp.eq.s32.totalorder %s34, 3
    %p538 = por %p536, %p537
    %p540 = scmp.ne.s32.totalorder %s525, %s539
    %p541 = scmp.eq.s32.totalorder %s34, 0
    %p542 = por %p540, %p541
    %s543 = ssub.s32 %s35, %s47
    %p544 = scmp.eq.s32.totalorder %s543, 0
    %s546 = sadd.s32 %s545, 1
    %s547 = scalar_select %p544, %s545, %s546
    %p550 = pneg %p544
    %p551 = scmp.eq.s32.totalorder %s28, 3
    %p552 = por %p550, %p551
    %p553 = scmp.ne.s32.totalorder %s545, %s548
    %p554 = scmp.eq.s32.totalorder %s28, 0
    %p555 = por %p553, %p554
    %p556 = scmp.ne.s32.totalorder %s545, %s548
    %p557 = scmp.eq.s32.totalorder %s33, 3
    %p558 = por %p556, %p557
    %p559 = scmp.ne.s32.totalorder %s548, %s549
    %p560 = scmp.eq.s32.totalorder %s33, 0
    %p561 = por %p559, %p560
    %p562 = scmp.ne.s32.totalorder %s548, %s549
    %p563 = scmp.eq.s32.totalorder %s34, 3
    %p564 = por %p562, %p563
    %p566 = scmp.ne.s32.totalorder %s549, %s565
    %p567 = scmp.eq.s32.totalorder %s34, 0
    %p568 = por %p566, %p567
    %p569 = scmp.le.s32.totalorder 1, %s28
    %p570 = scmp.lt.s32.totalorder %s28, 5
    %p571 = pnand %p569, %p570
    %p572 = pneg %p571
    // Predicated region
    $region9: #{tpu_custom_call.1} parent=5 // pred_check
      _
    $region10: #{tpu_custom_call.1} parent=5 // pred_check_branch
      %574 = sbr.rel (%p571) target = $region12
    $region11: #{tpu_custom_call.1} parent=5 // pred_region
      %s575 = ssub.s32 %s28, 1
      // Predicated region
      $region13: #{tpu_custom_call.1} parent=11 // pred_check
        %p576 = pneg %p139
      $region14: #{tpu_custom_call.1} parent=11 // pred_check_branch
        %578 = sbr.rel (%p576) target = $region16
      $region15: #{tpu_custom_call.1} parent=11 // pred_region
        _
      $region16: #{tpu_custom_call.1} parent=11 // pred_fallthru
        _
      // Predicated region
      $region17: #{tpu_custom_call.1} parent=11 // pred_check
        %p579 = pneg %p472
      $region18: #{tpu_custom_call.1} parent=11 // pred_check_branch
        %581 = sbr.rel (%p579) target = $region20
      $region19: #{tpu_custom_call.1} parent=11 // pred_region
        _
      $region20: #{tpu_custom_call.1} parent=11 // pred_fallthru
        _
      // Predicated region
      $region21: #{tpu_custom_call.1} parent=11 // pred_check
        %p582 = pneg %p493
      $region22: #{tpu_custom_call.1} parent=11 // pred_check_branch
        %584 = sbr.rel (%p582) target = $region24
      $region23: #{tpu_custom_call.1} parent=11 // pred_region
        _
      $region24: #{tpu_custom_call.1} parent=11 // pred_fallthru
        _
      // Predicated region
      $region25: #{tpu_custom_call.1} parent=11 // pred_check
        %p585 = pneg %p514
      $region26: #{tpu_custom_call.1} parent=11 // pred_check_branch
        %587 = sbr.rel (%p585) target = $region28
      $region27: #{tpu_custom_call.1} parent=11 // pred_region
        _
      $region28: #{tpu_custom_call.1} parent=11 // pred_fallthru
        _
      // Predicated region
      $region29: #{tpu_custom_call.1} parent=11 // pred_check
        %p588 = pneg %p535
      $region30: #{tpu_custom_call.1} parent=11 // pred_check_branch
        %590 = sbr.rel (%p588) target = $region32
      $region31: #{tpu_custom_call.1} parent=11 // pred_region
        _
      $region32: #{tpu_custom_call.1} parent=11 // pred_fallthru
        _
    $region12: #{tpu_custom_call.1} parent=5 // pred_fallthru
      _
    %p591 = scmp.lt.s32.totalorder %s28, 4
    // Predicated region
    $region33: #{tpu_custom_call.1} parent=5 // pred_check
      %p592 = pneg %p591
    $region34: #{tpu_custom_call.1} parent=5 // pred_check_branch
      %594 = sbr.rel (%p592) target = $region36
    $region35: #{tpu_custom_call.1} parent=5 // pred_region
      // Predicated region
      $region37: #{tpu_custom_call.1} parent=35 // pred_check
        %p595 = pneg %p60
      $region38: #{tpu_custom_call.1} parent=35 // pred_check_branch
        %597 = sbr.rel (%p595) target = $region40
      $region39: #{tpu_custom_call.1} parent=35 // pred_region
        %p598 = scmp.lt.s32.totalorder %s35, 1
        %s599 = scalar_select %p598, %s35, 1
        %s600 = smul.addr %s599, 8
        %s601 = scalar_lea.vmem %s0, %s600
      $region40: #{tpu_custom_call.1} parent=35 // pred_fallthru
        _
      // Predicated region
      $region41: #{tpu_custom_call.1} parent=35 // pred_check
        %p602 = pneg %p86
      $region42: #{tpu_custom_call.1} parent=35 // pred_check_branch
        %604 = sbr.rel (%p602) target = $region44
      $region43: #{tpu_custom_call.1} parent=35 // pred_region
        %p605 = scmp.lt.s32.totalorder %s35, 1
        %s606 = scalar_select %p605, %s35, 1
        %s607 = smul.addr %s606, 8
        %s608 = scalar_lea.vmem %s1, %s607
      $region44: #{tpu_custom_call.1} parent=35 // pred_fallthru
        _
      // Predicated region
      $region45: #{tpu_custom_call.1} parent=35 // pred_check
        %p609 = pneg %p112
      $region46: #{tpu_custom_call.1} parent=35 // pred_check_branch
        %611 = sbr.rel (%p609) target = $region48
      $region47: #{tpu_custom_call.1} parent=35 // pred_region
        %p612 = scmp.lt.s32.totalorder %s35, 1
        %s613 = scalar_select %p612, %s35, 1
        %s614 = scalar_lea.vmem %s2, %s613
      $region48: #{tpu_custom_call.1} parent=35 // pred_fallthru
        _
      // Predicated region
      $region49: #{tpu_custom_call.1} parent=35 // pred_check
        %p615 = pneg %p159
      $region50: #{tpu_custom_call.1} parent=35 // pred_check_branch
        %617 = sbr.rel (%p615) target = $region52
      $region51: #{tpu_custom_call.1} parent=35 // pred_region
        %p618 = scmp.lt.s32.totalorder %s36, 1
        %s619 = scalar_select %p618, %s36, 1
        %s620 = smul.addr %s619, 4
        %s621 = smul.addr %s620, 4
        %s622 = scalar_lea.vmem %s4, %s621
      $region52: #{tpu_custom_call.1} parent=35 // pred_fallthru
        _
      // Predicated region
      $region53: #{tpu_custom_call.1} parent=35 // pred_check
        %p623 = pneg %p185
      $region54: #{tpu_custom_call.1} parent=35 // pred_check_branch
        %625 = sbr.rel (%p623) target = $region56
      $region55: #{tpu_custom_call.1} parent=35 // pred_region
        %p626 = scmp.lt.s32.totalorder %s36, 1
        %s627 = scalar_select %p626, %s36, 1
        %s628 = scalar_lea.vmem %s5, %s627
      $region56: #{tpu_custom_call.1} parent=35 // pred_fallthru
        _
      // Predicated region
      $region57: #{tpu_custom_call.1} parent=35 // pred_check
        %p629 = pneg %p211
      $region58: #{tpu_custom_call.1} parent=35 // pred_check_branch
        %631 = sbr.rel (%p629) target = $region60
      $region59: #{tpu_custom_call.1} parent=35 // pred_region
        %p632 = scmp.lt.s32.totalorder %s36, 1
        %s633 = scalar_select %p632, %s36, 1
        %s634 = smul.addr %s633, 4
        %s635 = smul.addr %s634, 4
        %s636 = scalar_lea.vmem %s6, %s635
      $region60: #{tpu_custom_call.1} parent=35 // pred_fallthru
        _
      // Predicated region
      $region61: #{tpu_custom_call.1} parent=35 // pred_check
        %p637 = pneg %p237
      $region62: #{tpu_custom_call.1} parent=35 // pred_check_branch
        %639 = sbr.rel (%p637) target = $region64
      $region63: #{tpu_custom_call.1} parent=35 // pred_region
        %p640 = scmp.lt.s32.totalorder %s36, 1
        %s641 = scalar_select %p640, %s36, 1
        %s642 = scalar_lea.vmem %s7, %s641
      $region64: #{tpu_custom_call.1} parent=35 // pred_fallthru
        _
      // Predicated region
      $region65: #{tpu_custom_call.1} parent=35 // pred_check
        %p643 = pneg %p263
      $region66: #{tpu_custom_call.1} parent=35 // pred_check_branch
        %645 = sbr.rel (%p643) target = $region68
      $region67: #{tpu_custom_call.1} parent=35 // pred_region
        %p646 = scmp.lt.s32.totalorder %s36, 1
        %s647 = scalar_select %p646, %s36, 1
        %s648 = scalar_lea.vmem %s8, %s647
      $region68: #{tpu_custom_call.1} parent=35 // pred_fallthru
        _
      // Predicated region
      $region69: #{tpu_custom_call.1} parent=35 // pred_check
        %p649 = pneg %p289
      $region70: #{tpu_custom_call.1} parent=35 // pred_check_branch
        %651 = sbr.rel (%p649) target = $region72
      $region71: #{tpu_custom_call.1} parent=35 // pred_region
        %p652 = scmp.lt.s32.totalorder %s36, 1
        %s653 = scalar_select %p652, %s36, 1
        %s654 = scalar_lea.vmem %s9, %s653
      $region72: #{tpu_custom_call.1} parent=35 // pred_fallthru
        _
      // Predicated region
      $region73: #{tpu_custom_call.1} parent=35 // pred_check
        %p655 = pneg %p315
      $region74: #{tpu_custom_call.1} parent=35 // pred_check_branch
        %657 = sbr.rel (%p655) target = $region76
      $region75: #{tpu_custom_call.1} parent=35 // pred_region
        %p658 = scmp.lt.s32.totalorder %s36, 1
        %s659 = scalar_select %p658, %s36, 1
        %s660 = scalar_lea.vmem %s10, %s659
      $region76: #{tpu_custom_call.1} parent=35 // pred_fallthru
        _
      // Predicated region
      $region77: #{tpu_custom_call.1} parent=35 // pred_check
        %p661 = pneg %p341
      $region78: #{tpu_custom_call.1} parent=35 // pred_check_branch
        %663 = sbr.rel (%p661) target = $region80
      $region79: #{tpu_custom_call.1} parent=35 // pred_region
        %p664 = scmp.lt.s32.totalorder %s36, 1
        %s665 = scalar_select %p664, %s36, 1
        %s666 = scalar_lea.vmem %s11, %s665
      $region80: #{tpu_custom_call.1} parent=35 // pred_fallthru
        _
      // Predicated region
      $region81: #{tpu_custom_call.1} parent=35 // pred_check
        %p667 = pneg %p367
      $region82: #{tpu_custom_call.1} parent=35 // pred_check_branch
        %669 = sbr.rel (%p667) target = $region84
      $region83: #{tpu_custom_call.1} parent=35 // pred_region
        %p670 = scmp.lt.s32.totalorder %s36, 1
        %s671 = scalar_select %p670, %s36, 1
        %s672 = smul.addr %s671, 4
        %s673 = smul.addr %s672, 4
        %s674 = scalar_lea.vmem %s12, %s673
      $region84: #{tpu_custom_call.1} parent=35 // pred_fallthru
        _
      // Predicated region
      $region85: #{tpu_custom_call.1} parent=35 // pred_check
        %p675 = pneg %p393
      $region86: #{tpu_custom_call.1} parent=35 // pred_check_branch
        %677 = sbr.rel (%p675) target = $region88
      $region87: #{tpu_custom_call.1} parent=35 // pred_region
        %p678 = scmp.lt.s32.totalorder %s36, 1
        %s679 = scalar_select %p678, %s36, 1
        %s680 = scalar_lea.vmem %s13, %s679
      $region88: #{tpu_custom_call.1} parent=35 // pred_fallthru
        _
      // Predicated region
      $region89: #{tpu_custom_call.1} parent=35 // pred_check
        %p681 = pneg %p419
      $region90: #{tpu_custom_call.1} parent=35 // pred_check_branch
        %683 = sbr.rel (%p681) target = $region92
      $region91: #{tpu_custom_call.1} parent=35 // pred_region
        %p684 = scmp.lt.s32.totalorder %s36, 1
        %s685 = scalar_select %p684, %s36, 1
        %s686 = smul.addr %s685, 8
        %s687 = smul.addr %s686, 4
        %s688 = scalar_lea.vmem %s14, %s687
      $region92: #{tpu_custom_call.1} parent=35 // pred_fallthru
        _
      // Predicated region
      $region93: #{tpu_custom_call.1} parent=35 // pred_check
        %p689 = pneg %p445
      $region94: #{tpu_custom_call.1} parent=35 // pred_check_branch
        %691 = sbr.rel (%p689) target = $region96
      $region95: #{tpu_custom_call.1} parent=35 // pred_region
        %p692 = scmp.lt.s32.totalorder %s36, 1
        %s693 = scalar_select %p692, %s36, 1
        %s694 = scalar_lea.vmem %s15, %s693
      $region96: #{tpu_custom_call.1} parent=35 // pred_fallthru
        _
    $region36: #{tpu_custom_call.1} parent=5 // pred_fallthru
      _
    %p695 = scmp.le.s32.totalorder 1, %s28
    %p696 = scmp.lt.s32.totalorder %s28, 5
    %p697 = pnand %p695, %p696
    %p698 = pneg %p697
    // Predicated region
    $region97: #{tpu_custom_call.1} parent=5 // pred_check
      _
    $region98: #{tpu_custom_call.1} parent=5 // pred_check_branch
      %700 = sbr.rel (%p697) target = $region100
    $region99: #{tpu_custom_call.1} parent=5 // pred_region
      %s701 = ssub.s32 %s28, 1
      %p702 = scmp.lt.s32.totalorder %s37, 1
      %s703 = scalar_select %p702, %s37, 1
      %s704 = smul.addr %s703, 8
      %s705 = scalar_lea.vmem %s0, %s704
      %p706 = pneg %p66
      %p707 = pneg %p63
      %p708 = scmp.lt.s32.totalorder %s37, 1
      %s709 = scalar_select %p708, %s37, 1
      %s710 = smul.addr %s709, 8
      %s711 = scalar_lea.vmem %s1, %s710
      %p712 = pneg %p92
      %p713 = pneg %p89
      %p714 = scmp.lt.s32.totalorder %s37, 1
      %s715 = scalar_select %p714, %s37, 1
      %s716 = scalar_lea.vmem %s2, %s715
      %p717 = pneg %p118
      %p718 = pneg %p115
      %p719 = pneg %p139
      %p720 = pneg %p136
      %p721 = scmp.lt.s32.totalorder %s38, 1
      %s722 = scalar_select %p721, %s38, 1
      %s723 = smul.addr %s722, 4
      %s724 = smul.addr %s723, 4
      %s725 = scalar_lea.vmem %s4, %s724
      %p726 = pneg %p165
      %p727 = pneg %p162
      %p728 = scmp.lt.s32.totalorder %s38, 1
      %s729 = scalar_select %p728, %s38, 1
      %s730 = scalar_lea.vmem %s5, %s729
      %p731 = pneg %p191
      %p732 = pneg %p188
      %p733 = scmp.lt.s32.totalorder %s38, 1
      %s734 = scalar_select %p733, %s38, 1
      %s735 = smul.addr %s734, 4
      %s736 = smul.addr %s735, 4
      %s737 = scalar_lea.vmem %s6, %s736
      %p738 = pneg %p217
      %p739 = pneg %p214
      %p740 = scmp.lt.s32.totalorder %s38, 1
      %s741 = scalar_select %p740, %s38, 1
      %s742 = scalar_lea.vmem %s7, %s741
      %p743 = pneg %p243
      %p744 = pneg %p240
      %p745 = scmp.lt.s32.totalorder %s38, 1
      %s746 = scalar_select %p745, %s38, 1
      %s747 = scalar_lea.vmem %s8, %s746
      %p748 = pneg %p269
      %p749 = pneg %p266
      %p750 = scmp.lt.s32.totalorder %s38, 1
      %s751 = scalar_select %p750, %s38, 1
      %s752 = scalar_lea.vmem %s9, %s751
      %p753 = pneg %p295
      %p754 = pneg %p292
      %p755 = scmp.lt.s32.totalorder %s38, 1
      %s756 = scalar_select %p755, %s38, 1
      %s757 = scalar_lea.vmem %s10, %s756
      %p758 = pneg %p321
      %p759 = pneg %p318
      %p760 = scmp.lt.s32.totalorder %s38, 1
      %s761 = scalar_select %p760, %s38, 1
      %s762 = scalar_lea.vmem %s11, %s761
      %p763 = pneg %p347
      %p764 = pneg %p344
      %p765 = scmp.lt.s32.totalorder %s38, 1
      %s766 = scalar_select %p765, %s38, 1
      %s767 = smul.addr %s766, 4
      %s768 = smul.addr %s767, 4
      %s769 = scalar_lea.vmem %s12, %s768
      %p770 = pneg %p373
      %p771 = pneg %p370
      %p772 = scmp.lt.s32.totalorder %s38, 1
      %s773 = scalar_select %p772, %s38, 1
      %s774 = scalar_lea.vmem %s13, %s773
      %p775 = pneg %p399
      %p776 = pneg %p396
      %p777 = scmp.lt.s32.totalorder %s38, 1
      %s778 = scalar_select %p777, %s38, 1
      %s779 = smul.addr %s778, 8
      %s780 = smul.addr %s779, 4
      %s781 = scalar_lea.vmem %s14, %s780
      %p782 = pneg %p425
      %p783 = pneg %p422
      %p784 = scmp.lt.s32.totalorder %s38, 1
      %s785 = scalar_select %p784, %s38, 1
      %s786 = scalar_lea.vmem %s15, %s785
      %p787 = pneg %p451
      %p788 = pneg %p448
      %p789 = pneg %p472
      %p790 = pneg %p469
      %p791 = pneg %p493
      %p792 = pneg %p490
      %p793 = pneg %p514
      %p794 = pneg %p511
      %p795 = pneg %p535
      %p796 = pneg %p532
      %p797 = pneg %p561
      %p798 = pneg %p558
      %p799 = scmp.lt.s32.totalorder %s37, 1
      %s800 = scalar_select %p799, %s37, 1
      %s801 = smul.addr %s800, 8
      %s802 = scalar_lea.vmem %s20, %s801
      %p803 = scmp.lt.s32.totalorder %s37, 1
      %s804 = scalar_select %p803, %s37, 1
      %s805 = smul.addr %s804, 8
      %s806 = scalar_lea.vmem %s0, %s805
      %p807 = scmp.lt.s32.totalorder %s37, 1
      %s808 = scalar_select %p807, %s37, 1
      %s809 = smul.addr %s808, 8
      %s810 = scalar_lea.vmem %s1, %s809
      %p811 = scmp.lt.s32.totalorder %s37, 1
      %s812 = scalar_select %p811, %s37, 1
      %s813 = scalar_lea.vmem %s2, %s812
      %p814 = scmp.lt.s32.totalorder %s38, 1
      %s815 = scalar_select %p814, %s38, 1
      %s816 = smul.addr %s815, 4
      %s817 = smul.addr %s816, 4
      %s818 = scalar_lea.vmem %s4, %s817
      %p819 = scmp.lt.s32.totalorder %s38, 1
      %s820 = scalar_select %p819, %s38, 1
      %s821 = scalar_lea.vmem %s5, %s820
      %p822 = scmp.lt.s32.totalorder %s38, 1
      %s823 = scalar_select %p822, %s38, 1
      %s824 = smul.addr %s823, 4
      %s825 = smul.addr %s824, 4
      %s826 = scalar_lea.vmem %s6, %s825
      %p827 = scmp.lt.s32.totalorder %s38, 1
      %s828 = scalar_select %p827, %s38, 1
      %s829 = scalar_lea.vmem %s7, %s828
      %p830 = scmp.lt.s32.totalorder %s38, 1
      %s831 = scalar_select %p830, %s38, 1
      %s832 = scalar_lea.vmem %s8, %s831
      %p833 = scmp.lt.s32.totalorder %s38, 1
      %s834 = scalar_select %p833, %s38, 1
      %s835 = scalar_lea.vmem %s9, %s834
      %p836 = scmp.lt.s32.totalorder %s38, 1
      %s837 = scalar_select %p836, %s38, 1
      %s838 = scalar_lea.vmem %s10, %s837
      %p839 = scmp.lt.s32.totalorder %s38, 1
      %s840 = scalar_select %p839, %s38, 1
      %s841 = scalar_lea.vmem %s11, %s840
      %p842 = scmp.lt.s32.totalorder %s38, 1
      %s843 = scalar_select %p842, %s38, 1
      %s844 = smul.addr %s843, 4
      %s845 = smul.addr %s844, 4
      %s846 = scalar_lea.vmem %s12, %s845
      %p847 = scmp.lt.s32.totalorder %s38, 1
      %s848 = scalar_select %p847, %s38, 1
      %s849 = scalar_lea.vmem %s13, %s848
      %p850 = scmp.lt.s32.totalorder %s38, 1
      %s851 = scalar_select %p850, %s38, 1
      %s852 = smul.addr %s851, 8
      %s853 = smul.addr %s852, 4
      %s854 = scalar_lea.vmem %s14, %s853
      %p855 = scmp.lt.s32.totalorder %s38, 1
      %s856 = scalar_select %p855, %s38, 1
      %s857 = scalar_lea.vmem %s15, %s856
      %p858 = scmp.lt.s32.totalorder %s37, 1
      %s859 = scalar_select %p858, %s37, 1
      %s860 = smul.addr %s859, 8
      %s861 = scalar_lea.vmem %s20, %s860
      %p863 = scmp.eq.s32.totalorder %s38, 0
      // Predicated region
      $region101: #{tpu_custom_call.1} parent=99 // pred_check
        %p864 = pneg %p863
      $region102: #{tpu_custom_call.1} parent=99 // pred_check_branch
        %866 = sbr.rel (%p864) target = $region104
      $region103: #{tpu_custom_call.1} parent=99 // pred_region
        %v867 = vld [vmem:[%s806] sm:$0xff]
        %v868 = vld [vmem:[%s810] sm:$0xff]
        %870 = vset.pattern.permute.xlu0 0
        %871 = vperm.xlu0 %870, %v868
        %v872 = vpop.permute.xlu0 %871
        %v874 = vmul.f32 %v867, %v872
        %v875 = vld [vmem:[%s3] sm:$0xff]
        %v876 = vadd.f32 %v874, %v875
        %vm877 = vcmask 261120
        %878 = vst.msk [vmem:[#allocation2] sm:$0xff] %vm877, %v876
      $region104: #{tpu_custom_call.1} parent=99 // pred_fallthru
        _
      %v879 = vld [vmem:[#allocation2] sm:$0xff]
      %v880 = vld [vmem:[%s832] sm:$0x1]
      %v881 = vld [vmem:[%s835] sm:$0x1]
      %vm882 = vcmask 261120
      %v883 = vsel %vm882, %v879, 0.0
      %884 = vadd.xlane.f32.xlu0 %v883
      %v885 = vpop.xlane.xlu0 %884
      %v886 = vrcp.pop 32.0
      %v887 = vmul.f32 %v885, %v886
      %v888 = vsub.f32 %v879, %v887
      %v889 = vmul.f32 %v888, %v888
      %v890 = vsel %vm882, %v889, 0.0
      %891 = vadd.xlane.f32.xlu0 %v890
      %v892 = vpop.xlane.xlu0 %891
      %v893 = vmul.f32 %v892, %v886
      %v894 = vadd.f32 %v893, 1e-06
      %v895 = vrsqrt.pop %v894
      %v896 = vmul.f32 %v888, %v895
      %v898 = vlaneseq
      %v899 = vshrl.u32 %v898, 7
      %v900 = vsub.s32 0, %v899
      %v901 = vrot.slane %v880, %v900
      %v903 = vmul.f32 %v896, %v901
      %v905 = vlaneseq
      %v906 = vshrl.u32 %v905, 7
      %v907 = vsub.s32 0, %v906
      %v908 = vrot.slane %v881, %v907
      %v910 = vadd.f32 %v903, %v908
      %s911 = scalar_select %p863, 1, 0
      %v912 = vstv %s911
      %vm913 = vcmp.eq.s32.totalorder %v912, 1
      %v914 = vsel %vm913, %v879, %v910
      %v915 = vpack.c.bf16 %v914, %v914
      %v916 = vld [vmem:[%s818] sm:$0xf]
      %v917 = vld [vmem:[%s818 + $0x4] sm:$0xf]
      %v918 = vld [vmem:[%s818 + $0x8] sm:$0xf]
      %v919 = vld [vmem:[%s818 + $0xc] sm:$0xf]
      %v920 = vld [vmem:[%s821] sm:$0x1]
      %v922 = vlaneseq
      %v923 = vshrl.u32 %v922, 7
      %v924 = vsub.s32 0, %v923
      %v925 = vrot.slane %v920, %v924
      %v931 = vunpack.c.l.b16 %v916
      %v932 = vunpack.c.l.b16 %v917
      %v933 = vunpack.c.l.b16 %v918
      %v934 = vunpack.c.l.b16 %v919
      %v935 = vpack.c.b16 %v932, %v931
      %v936 = vpack.c.b16 %v934, %v933
      %v940 = vsel %vm882, %v915, 0
      %942 = vmatprep.subr.bf16.mxu0 0
      %943 = vmatpush1.bf16.msra.mxu0 %v935
      %944 = vmatprep.subr.bf16.mxu0 0
      %945 = vmatpush1.bf16.msra.mxu0 %v936
      %946 = vmatprep.subr.bf16.mxu0 0
      %947 = vmatpush1.bf16.msra.mxu0 0
      %948 = vmatprep.subr.bf16.mxu0 0
      %949 = vmatpush1.bf16.msra.mxu0 0
      %950 = vmatprep.subr.bf16.mxu0 0
      %951 = vmatpush1.bf16.msra.mxu0 0
      %952 = vmatprep.subr.bf16.mxu0 0
      %953 = vmatpush1.bf16.msra.mxu0 0
      %954 = vmatprep.subr.bf16.mxu0 0
      %955 = vmatpush1.bf16.msra.mxu0 0
      %956 = vmatprep.subr.bf16.mxu0 0
      %957 = vmatpush1.bf16.msra.mxu0 0
      %958 = vmatprep.subr.bf16.mxu0 0
      %959 = vmatpush1.bf16.msra.mxu0 0
      %960 = vmatprep.subr.bf16.mxu0 0
      %961 = vmatpush1.bf16.msra.mxu0 0
      %962 = vmatprep.subr.bf16.mxu0 0
      %963 = vmatpush1.bf16.msra.mxu0 0
      %964 = vmatprep.subr.bf16.mxu0 0
      %965 = vmatpush1.bf16.msra.mxu0 0
      %966 = vmatprep.subr.bf16.mxu0 0
      %967 = vmatpush1.bf16.msra.mxu0 0
      %968 = vmatprep.subr.bf16.mxu0 0
      %969 = vmatpush1.bf16.msra.mxu0 0
      %970 = vmatprep.subr.bf16.mxu0 0
      %971 = vmatpush1.bf16.msra.mxu0 0
      %972 = vmatprep.subr.bf16.mxu0 0
      %973 = vmatpush1.bf16.msra.mxu0 0
      %974 = vmatprep.mubr.bf16.mxu0 0
      %975 = vmatmul.mubr.bf16.gmra.mrb[0].mxu0 %v940
      %v976 = vpop.f32.mrb[0].mxu0
      %v977 = vadd.f32 %v925, %v976
      %v978 = vpop.f32.mrb[0].mxu0
      %v979 = vpop.f32.mrb[0].mxu0
      %v980 = vpop.f32.mrb[0].mxu0
      %981 = vdwg.mxu0
      %983 = vrot.lane.b32.xlu0 %v977, 120
      %v984 = vpop.permute.xlu0 %983
      %986 = vrot.lane.b32.xlu0 %v977, 112
      %v987 = vpop.permute.xlu0 %986
      %989 = vrot.lane.b32.xlu0 %v977, 104
      %v990 = vpop.permute.xlu0 %989
      %v992 = vpack.c.bf16 %v977, %v977
      %v993 = vpack.c.bf16 %v984, %v984
      %v994 = vpack.c.bf16 %v987, %v987
      %v995 = vpack.c.bf16 %v990, %v990
      %v996 = vld [vmem:[%s813] sm:$0x1]
      %vm997 = vcmp.lt.f32.partialorder %v996, 0.5
      %v998 = vsel %vm997, -1e+18, 0.0
      %v1000 = vlaneseq
      %v1001 = vshrl.u32 %v1000, 7
      %v1002 = vsub.s32 0, %v1001
      %v1003 = vrot.slane %v998, %v1002
      %1006 = vrot.lane.b32.xlu0 %v992, 96
      %v1007 = vpop.permute.xlu0 %1006
      %vm1008 = vcmask 64512
      %v1010 = vsel %vm1008, %v992, 0
      %v1013 = vsel %vm1008, %v1007, 0
      %1015 = vmatprep.subr.bf16.mxu0 0
      %1016 = vmatpush1.bf16.xpose.msra.mxu0 %v1013
      %1017 = vmatprep.subr.bf16.mxu0 0
      %1018 = vmatpush1.bf16.xpose.msra.mxu0 0
      %1019 = vmatprep.subr.bf16.mxu0 0
      %1020 = vmatpush1.bf16.xpose.msra.mxu0 0
      %1021 = vmatprep.subr.bf16.mxu0 0
      %1022 = vmatpush1.bf16.xpose.msra.mxu0 0
      %1023 = vmatprep.subr.bf16.mxu0 0
      %1024 = vmatpush1.bf16.xpose.msra.mxu0 0
      %1025 = vmatprep.subr.bf16.mxu0 0
      %1026 = vmatpush1.bf16.xpose.msra.mxu0 0
      %1027 = vmatprep.subr.bf16.mxu0 0
      %1028 = vmatpush1.bf16.xpose.msra.mxu0 0
      %1029 = vmatprep.subr.bf16.mxu0 0
      %1030 = vmatpush1.bf16.xpose.msra.mxu0 0
      %1031 = vmatprep.subr.bf16.mxu0 0
      %1032 = vmatpush1.bf16.xpose.msra.mxu0 0
      %1033 = vmatprep.subr.bf16.mxu0 0
      %1034 = vmatpush1.bf16.xpose.msra.mxu0 0
      %1035 = vmatprep.subr.bf16.mxu0 0
      %1036 = vmatpush1.bf16.xpose.msra.mxu0 0
      %1037 = vmatprep.subr.bf16.mxu0 0
      %1038 = vmatpush1.bf16.xpose.msra.mxu0 0
      %1039 = vmatprep.subr.bf16.mxu0 0
      %1040 = vmatpush1.bf16.xpose.msra.mxu0 0
      %1041 = vmatprep.subr.bf16.mxu0 0
      %1042 = vmatpush1.bf16.xpose.msra.mxu0 0
      %1043 = vmatprep.subr.bf16.mxu0 0
      %1044 = vmatpush1.bf16.xpose.msra.mxu0 0
      %1045 = vmatprep.subr.bf16.mxu0 0
      %1046 = vmatpush1.bf16.xpose.msra.mxu0 0
      %1047 = vmatprep.mubr.bf16.mxu0 0
      %1048 = vmatmul.mubr.bf16.gmra.mrb[0].mxu0 %v1010
      %v1049 = vpop.f32.mrb[0].mxu0
      %v1050 = vadd.f32 %v1003, %v1049
      %v1051 = vpop.f32.mrb[0].mxu0
      %v1052 = vpop.f32.mrb[0].mxu0
      %v1053 = vpop.f32.mrb[0].mxu0
      %1054 = vdwg.mxu0
      %1056 = vrot.lane.b32.xlu0 %v993, 96
      %v1057 = vpop.permute.xlu0 %1056
      %v1059 = vsel %vm1008, %v993, 0
      %v1062 = vsel %vm1008, %v1057, 0
      %1064 = vmatprep.subr.bf16.mxu0 0
      %1065 = vmatpush1.bf16.xpose.msra.mxu0 %v1062
      %1066 = vmatprep.subr.bf16.mxu0 0
      %1067 = vmatpush1.bf16.xpose.msra.mxu0 0
      %1068 = vmatprep.subr.bf16.mxu0 0
      %1069 = vmatpush1.bf16.xpose.msra.mxu0 0
      %1070 = vmatprep.subr.bf16.mxu0 0
      %1071 = vmatpush1.bf16.xpose.msra.mxu0 0
      %1072 = vmatprep.subr.bf16.mxu0 0
      %1073 = vmatpush1.bf16.xpose.msra.mxu0 0
      %1074 = vmatprep.subr.bf16.mxu0 0
      %1075 = vmatpush1.bf16.xpose.msra.mxu0 0
      %1076 = vmatprep.subr.bf16.mxu0 0
      %1077 = vmatpush1.bf16.xpose.msra.mxu0 0
      %1078 = vmatprep.subr.bf16.mxu0 0
      %1079 = vmatpush1.bf16.xpose.msra.mxu0 0
      %1080 = vmatprep.subr.bf16.mxu0 0
      %1081 = vmatpush1.bf16.xpose.msra.mxu0 0
      %1082 = vmatprep.subr.bf16.mxu0 0
      %1083 = vmatpush1.bf16.xpose.msra.mxu0 0
      %1084 = vmatprep.subr.bf16.mxu0 0
      %1085 = vmatpush1.bf16.xpose.msra.mxu0 0
      %1086 = vmatprep.subr.bf16.mxu0 0
      %1087 = vmatpush1.bf16.xpose.msra.mxu0 0
      %1088 = vmatprep.subr.bf16.mxu0 0
      %1089 = vmatpush1.bf16.xpose.msra.mxu0 0
      %1090 = vmatprep.subr.bf16.mxu0 0
      %1091 = vmatpush1.bf16.xpose.msra.mxu0 0
      %1092 = vmatprep.subr.bf16.mxu0 0
      %1093 = vmatpush1.bf16.xpose.msra.mxu0 0
      %1094 = vmatprep.subr.bf16.mxu0 0
      %1095 = vmatpush1.bf16.xpose.msra.mxu0 0
      %1096 = vmatprep.mubr.bf16.mxu0 0
      %1097 = vmatmul.mubr.bf16.gmra.mrb[0].mxu0 %v1059
      %v1098 = vpop.f32.mrb[0].mxu0
      %v1099 = vadd.f32 %v1003, %v1098
      %v1100 = vpop.f32.mrb[0].mxu0
      %v1101 = vpop.f32.mrb[0].mxu0
      %v1102 = vpop.f32.mrb[0].mxu0
      %1103 = vdwg.mxu0
      %1105 = vrot.lane.b32.xlu0 %v994, 96
      %v1106 = vpop.permute.xlu0 %1105
      %v1108 = vsel %vm1008, %v994, 0
      %v1111 = vsel %vm1008, %v1106, 0
      %1113 = vmatprep.subr.bf16.mxu0 0
      %1114 = vmatpush1.bf16.xpose.msra.mxu0 %v1111
      %1115 = vmatprep.subr.bf16.mxu0 0
      %1116 = vmatpush1.bf16.xpose.msra.mxu0 0
      %1117 = vmatprep.subr.bf16.mxu0 0
      %1118 = vmatpush1.bf16.xpose.msra.mxu0 0
      %1119 = vmatprep.subr.bf16.mxu0 0
      %1120 = vmatpush1.bf16.xpose.msra.mxu0 0
      %1121 = vmatprep.subr.bf16.mxu0 0
      %1122 = vmatpush1.bf16.xpose.msra.mxu0 0
      %1123 = vmatprep.subr.bf16.mxu0 0
      %1124 = vmatpush1.bf16.xpose.msra.mxu0 0
      %1125 = vmatprep.subr.bf16.mxu0 0
      %1126 = vmatpush1.bf16.xpose.msra.mxu0 0
      %1127 = vmatprep.subr.bf16.mxu0 0
      %1128 = vmatpush1.bf16.xpose.msra.mxu0 0
      %1129 = vmatprep.subr.bf16.mxu0 0
      %1130 = vmatpush1.bf16.xpose.msra.mxu0 0
      %1131 = vmatprep.subr.bf16.mxu0 0
      %1132 = vmatpush1.bf16.xpose.msra.mxu0 0
      %1133 = vmatprep.subr.bf16.mxu0 0
      %1134 = vmatpush1.bf16.xpose.msra.mxu0 0
      %1135 = vmatprep.subr.bf16.mxu0 0
      %1136 = vmatpush1.bf16.xpose.msra.mxu0 0
      %1137 = vmatprep.subr.bf16.mxu0 0
      %1138 = vmatpush1.bf16.xpose.msra.mxu0 0
      %1139 = vmatprep.subr.bf16.mxu0 0
      %1140 = vmatpush1.bf16.xpose.msra.mxu0 0
      %1141 = vmatprep.subr.bf16.mxu0 0
      %1142 = vmatpush1.bf16.xpose.msra.mxu0 0
      %1143 = vmatprep.subr.bf16.mxu0 0
      %1144 = vmatpush1.bf16.xpose.msra.mxu0 0
      %1145 = vmatprep.mubr.bf16.mxu0 0
      %1146 = vmatmul.mubr.bf16.gmra.mrb[0].mxu0 %v1108
      %v1147 = vpop.f32.mrb[0].mxu0
      %v1148 = vadd.f32 %v1003, %v1147
      %v1149 = vpop.f32.mrb[0].mxu0
      %v1150 = vpop.f32.mrb[0].mxu0
      %v1151 = vpop.f32.mrb[0].mxu0
      %1152 = vdwg.mxu0
      %1154 = vrot.lane.b32.xlu0 %v995, 96
      %v1155 = vpop.permute.xlu0 %1154
      %v1157 = vsel %vm1008, %v995, 0
      %v1160 = vsel %vm1008, %v1155, 0
      %1162 = vmatprep.subr.bf16.mxu0 0
      %1163 = vmatpush1.bf16.xpose.msra.mxu0 %v1160
      %1164 = vmatprep.subr.bf16.mxu0 0
      %1165 = vmatpush1.bf16.xpose.msra.mxu0 0
      %1166 = vmatprep.subr.bf16.mxu0 0
      %1167 = vmatpush1.bf16.xpose.msra.mxu0 0
      %1168 = vmatprep.subr.bf16.mxu0 0
      %1169 = vmatpush1.bf16.xpose.msra.mxu0 0
      %1170 = vmatprep.subr.bf16.mxu0 0
      %1171 = vmatpush1.bf16.xpose.msra.mxu0 0
      %1172 = vmatprep.subr.bf16.mxu0 0
      %1173 = vmatpush1.bf16.xpose.msra.mxu0 0
      %1174 = vmatprep.subr.bf16.mxu0 0
      %1175 = vmatpush1.bf16.xpose.msra.mxu0 0
      %1176 = vmatprep.subr.bf16.mxu0 0
      %1177 = vmatpush1.bf16.xpose.msra.mxu0 0
      %1178 = vmatprep.subr.bf16.mxu0 0
      %1179 = vmatpush1.bf16.xpose.msra.mxu0 0
      %1180 = vmatprep.subr.bf16.mxu0 0
      %1181 = vmatpush1.bf16.xpose.msra.mxu0 0
      %1182 = vmatprep.subr.bf16.mxu0 0
      %1183 = vmatpush1.bf16.xpose.msra.mxu0 0
      %1184 = vmatprep.subr.bf16.mxu0 0
      %1185 = vmatpush1.bf16.xpose.msra.mxu0 0
      %1186 = vmatprep.subr.bf16.mxu0 0
      %1187 = vmatpush1.bf16.xpose.msra.mxu0 0
      %1188 = vmatprep.subr.bf16.mxu0 0
      %1189 = vmatpush1.bf16.xpose.msra.mxu0 0
      %1190 = vmatprep.subr.bf16.mxu0 0
      %1191 = vmatpush1.bf16.xpose.msra.mxu0 0
      %1192 = vmatprep.subr.bf16.mxu0 0
      %1193 = vmatpush1.bf16.xpose.msra.mxu0 0
      %1194 = vmatprep.mubr.bf16.mxu0 0
      %1195 = vmatmul.mubr.bf16.gmra.mrb[0].mxu0 %v1157
      %v1196 = vpop.f32.mrb[0].mxu0
      %v1197 = vadd.f32 %v1003, %v1196
      %v1198 = vpop.f32.mrb[0].mxu0
      %v1199 = vpop.f32.mrb[0].mxu0
      %v1200 = vpop.f32.mrb[0].mxu0
      %1201 = vdwg.mxu0
      %v1202 = vsel %vm1008, %v1050, -inf
      %1203 = vmax.xlane.f32.xlu0 %v1202
      %v1204 = vpop.xlane.xlu0 %1203
      %v1205 = vsel %vm1008, %v1099, -inf
      %1206 = vmax.xlane.f32.xlu0 %v1205
      %v1207 = vpop.xlane.xlu0 %1206
      %v1208 = vsel %vm1008, %v1148, -inf
      %1209 = vmax.xlane.f32.xlu0 %v1208
      %v1210 = vpop.xlane.xlu0 %1209
      %v1211 = vsel %vm1008, %v1197, -inf
      %1212 = vmax.xlane.f32.xlu0 %v1211
      %v1213 = vpop.xlane.xlu0 %1212
      %v1214 = vsub.f32 %v1050, %v1204
      %v1215 = vsub.f32 %v1099, %v1207
      %v1216 = vsub.f32 %v1148, %v1210
      %v1217 = vsub.f32 %v1197, %v1213
      %v1218 = vmul.f32 %v1214, 1.442695
      %v1219 = vpow.pop %v1218
      %v1220 = vmul.f32 %v1215, 1.442695
      %v1221 = vpow.pop %v1220
      %v1222 = vmul.f32 %v1216, 1.442695
      %v1223 = vpow.pop %v1222
      %v1224 = vmul.f32 %v1217, 1.442695
      %v1225 = vpow.pop %v1224
      %v1226 = vsel %vm1008, %v1219, 0.0
      %1227 = vadd.xlane.f32.xlu0 %v1226
      %v1228 = vpop.xlane.xlu0 %1227
      %v1229 = vsel %vm1008, %v1221, 0.0
      %1230 = vadd.xlane.f32.xlu0 %v1229
      %v1231 = vpop.xlane.xlu0 %1230
      %v1232 = vsel %vm1008, %v1223, 0.0
      %1233 = vadd.xlane.f32.xlu0 %v1232
      %v1234 = vpop.xlane.xlu0 %1233
      %v1235 = vsel %vm1008, %v1225, 0.0
      %1236 = vadd.xlane.f32.xlu0 %v1235
      %v1237 = vpop.xlane.xlu0 %1236
      %v1238 = vrcp.pop %v1228
      %v1239 = vrcp.pop %v1231
      %v1240 = vrcp.pop %v1234
      %v1241 = vrcp.pop %v1237
      %v1242 = vmul.f32 %v1219, %v1238
      %v1243 = vmul.f32 %v1221, %v1239
      %v1244 = vmul.f32 %v1223, %v1240
      %v1245 = vmul.f32 %v1225, %v1241
      %v1246 = vpack.c.bf16 %v1242, %v1242
      %v1247 = vpack.c.bf16 %v1243, %v1243
      %v1248 = vpack.c.bf16 %v1244, %v1244
      %v1249 = vpack.c.bf16 %v1245, %v1245
      %1250 = vrot.lane.b32.xlu0 %v992, 64
      %v1251 = vpop.permute.xlu0 %1250
      %v1253 = vsel %vm1008, %v1246, 0
      %vm1255 = vcmask 1043456
      %v1257 = vsel %vm1255, %v1251, 0
      %1259 = vmatprep.subr.bf16.mxu0 0
      %1260 = vmatpush1.bf16.msra.mxu0 %v1257
      %1261 = vmatprep.subr.bf16.mxu0 0
      %1262 = vmatpush1.bf16.msra.mxu0 0
      %1263 = vmatprep.subr.bf16.mxu0 0
      %1264 = vmatpush1.bf16.msra.mxu0 0
      %1265 = vmatprep.subr.bf16.mxu0 0
      %1266 = vmatpush1.bf16.msra.mxu0 0
      %1267 = vmatprep.subr.bf16.mxu0 0
      %1268 = vmatpush1.bf16.msra.mxu0 0
      %1269 = vmatprep.subr.bf16.mxu0 0
      %1270 = vmatpush1.bf16.msra.mxu0 0
      %1271 = vmatprep.subr.bf16.mxu0 0
      %1272 = vmatpush1.bf16.msra.mxu0 0
      %1273 = vmatprep.subr.bf16.mxu0 0
      %1274 = vmatpush1.bf16.msra.mxu0 0
      %1275 = vmatprep.subr.bf16.mxu0 0
      %1276 = vmatpush1.bf16.msra.mxu0 0
      %1277 = vmatprep.subr.bf16.mxu0 0
      %1278 = vmatpush1.bf16.msra.mxu0 0
      %1279 = vmatprep.subr.bf16.mxu0 0
      %1280 = vmatpush1.bf16.msra.mxu0 0
      %1281 = vmatprep.subr.bf16.mxu0 0
      %1282 = vmatpush1.bf16.msra.mxu0 0
      %1283 = vmatprep.subr.bf16.mxu0 0
      %1284 = vmatpush1.bf16.msra.mxu0 0
      %1285 = vmatprep.subr.bf16.mxu0 0
      %1286 = vmatpush1.bf16.msra.mxu0 0
      %1287 = vmatprep.subr.bf16.mxu0 0
      %1288 = vmatpush1.bf16.msra.mxu0 0
      %1289 = vmatprep.subr.bf16.mxu0 0
      %1290 = vmatpush1.bf16.msra.mxu0 0
      %1291 = vmatprep.mubr.bf16.mxu0 0
      %1292 = vmatmul.mubr.bf16.gmra.mrb[0].mxu0 %v1253
      %v1293 = vpop.f32.mrb[0].mxu0
      %v1294 = vadd.f32 0.0, %v1293
      %v1295 = vpop.f32.mrb[0].mxu0
      %v1296 = vpop.f32.mrb[0].mxu0
      %v1297 = vpop.f32.mrb[0].mxu0
      %1298 = vdwg.mxu0
      %1299 = vrot.lane.b32.xlu0 %v993, 64
      %v1300 = vpop.permute.xlu0 %1299
      %v1302 = vsel %vm1008, %v1247, 0
      %v1305 = vsel %vm1255, %v1300, 0
      %1307 = vmatprep.subr.bf16.mxu0 0
      %1308 = vmatpush1.bf16.msra.mxu0 %v1305
      %1309 = vmatprep.subr.bf16.mxu0 0
      %1310 = vmatpush1.bf16.msra.mxu0 0
      %1311 = vmatprep.subr.bf16.mxu0 0
      %1312 = vmatpush1.bf16.msra.mxu0 0
      %1313 = vmatprep.subr.bf16.mxu0 0
      %1314 = vmatpush1.bf16.msra.mxu0 0
      %1315 = vmatprep.subr.bf16.mxu0 0
      %1316 = vmatpush1.bf16.msra.mxu0 0
      %1317 = vmatprep.subr.bf16.mxu0 0
      %1318 = vmatpush1.bf16.msra.mxu0 0
      %1319 = vmatprep.subr.bf16.mxu0 0
      %1320 = vmatpush1.bf16.msra.mxu0 0
      %1321 = vmatprep.subr.bf16.mxu0 0
      %1322 = vmatpush1.bf16.msra.mxu0 0
      %1323 = vmatprep.subr.bf16.mxu0 0
      %1324 = vmatpush1.bf16.msra.mxu0 0
      %1325 = vmatprep.subr.bf16.mxu0 0
      %1326 = vmatpush1.bf16.msra.mxu0 0
      %1327 = vmatprep.subr.bf16.mxu0 0
      %1328 = vmatpush1.bf16.msra.mxu0 0
      %1329 = vmatprep.subr.bf16.mxu0 0
      %1330 = vmatpush1.bf16.msra.mxu0 0
      %1331 = vmatprep.subr.bf16.mxu0 0
      %1332 = vmatpush1.bf16.msra.mxu0 0
      %1333 = vmatprep.subr.bf16.mxu0 0
      %1334 = vmatpush1.bf16.msra.mxu0 0
      %1335 = vmatprep.subr.bf16.mxu0 0
      %1336 = vmatpush1.bf16.msra.mxu0 0
      %1337 = vmatprep.subr.bf16.mxu0 0
      %1338 = vmatpush1.bf16.msra.mxu0 0
      %1339 = vmatprep.mubr.bf16.mxu0 0
      %1340 = vmatmul.mubr.bf16.gmra.mrb[0].mxu0 %v1302
      %v1341 = vpop.f32.mrb[0].mxu0
      %v1342 = vadd.f32 0.0, %v1341
      %v1343 = vpop.f32.mrb[0].mxu0
      %v1344 = vpop.f32.mrb[0].mxu0
      %v1345 = vpop.f32.mrb[0].mxu0
      %1346 = vdwg.mxu0
      %1347 = vrot.lane.b32.xlu0 %v994, 64
      %v1348 = vpop.permute.xlu0 %1347
      %v1350 = vsel %vm1008, %v1248, 0
      %v1353 = vsel %vm1255, %v1348, 0
      %1355 = vmatprep.subr.bf16.mxu0 0
      %1356 = vmatpush1.bf16.msra.mxu0 %v1353
      %1357 = vmatprep.subr.bf16.mxu0 0
      %1358 = vmatpush1.bf16.msra.mxu0 0
      %1359 = vmatprep.subr.bf16.mxu0 0
      %1360 = vmatpush1.bf16.msra.mxu0 0
      %1361 = vmatprep.subr.bf16.mxu0 0
      %1362 = vmatpush1.bf16.msra.mxu0 0
      %1363 = vmatprep.subr.bf16.mxu0 0
      %1364 = vmatpush1.bf16.msra.mxu0 0
      %1365 = vmatprep.subr.bf16.mxu0 0
      %1366 = vmatpush1.bf16.msra.mxu0 0
      %1367 = vmatprep.subr.bf16.mxu0 0
      %1368 = vmatpush1.bf16.msra.mxu0 0
      %1369 = vmatprep.subr.bf16.mxu0 0
      %1370 = vmatpush1.bf16.msra.mxu0 0
      %1371 = vmatprep.subr.bf16.mxu0 0
      %1372 = vmatpush1.bf16.msra.mxu0 0
      %1373 = vmatprep.subr.bf16.mxu0 0
      %1374 = vmatpush1.bf16.msra.mxu0 0
      %1375 = vmatprep.subr.bf16.mxu0 0
      %1376 = vmatpush1.bf16.msra.mxu0 0
      %1377 = vmatprep.subr.bf16.mxu0 0
      %1378 = vmatpush1.bf16.msra.mxu0 0
      %1379 = vmatprep.subr.bf16.mxu0 0
      %1380 = vmatpush1.bf16.msra.mxu0 0
      %1381 = vmatprep.subr.bf16.mxu0 0
      %1382 = vmatpush1.bf16.msra.mxu0 0
      %1383 = vmatprep.subr.bf16.mxu0 0
      %1384 = vmatpush1.bf16.msra.mxu0 0
      %1385 = vmatprep.subr.bf16.mxu0 0
      %1386 = vmatpush1.bf16.msra.mxu0 0
      %1387 = vmatprep.mubr.bf16.mxu0 0
      %1388 = vmatmul.mubr.bf16.gmra.mrb[0].mxu0 %v1350
      %v1389 = vpop.f32.mrb[0].mxu0
      %v1390 = vadd.f32 0.0, %v1389
      %v1391 = vpop.f32.mrb[0].mxu0
      %v1392 = vpop.f32.mrb[0].mxu0
      %v1393 = vpop.f32.mrb[0].mxu0
      %1394 = vdwg.mxu0
      %1395 = vrot.lane.b32.xlu0 %v995, 64
      %v1396 = vpop.permute.xlu0 %1395
      %v1398 = vsel %vm1008, %v1249, 0
      %v1401 = vsel %vm1255, %v1396, 0
      %1403 = vmatprep.subr.bf16.mxu0 0
      %1404 = vmatpush1.bf16.msra.mxu0 %v1401
      %1405 = vmatprep.subr.bf16.mxu0 0
      %1406 = vmatpush1.bf16.msra.mxu0 0
      %1407 = vmatprep.subr.bf16.mxu0 0
      %1408 = vmatpush1.bf16.msra.mxu0 0
      %1409 = vmatprep.subr.bf16.mxu0 0
      %1410 = vmatpush1.bf16.msra.mxu0 0
      %1411 = vmatprep.subr.bf16.mxu0 0
      %1412 = vmatpush1.bf16.msra.mxu0 0
      %1413 = vmatprep.subr.bf16.mxu0 0
      %1414 = vmatpush1.bf16.msra.mxu0 0
      %1415 = vmatprep.subr.bf16.mxu0 0
      %1416 = vmatpush1.bf16.msra.mxu0 0
      %1417 = vmatprep.subr.bf16.mxu0 0
      %1418 = vmatpush1.bf16.msra.mxu0 0
      %1419 = vmatprep.subr.bf16.mxu0 0
      %1420 = vmatpush1.bf16.msra.mxu0 0
      %1421 = vmatprep.subr.bf16.mxu0 0
      %1422 = vmatpush1.bf16.msra.mxu0 0
      %1423 = vmatprep.subr.bf16.mxu0 0
      %1424 = vmatpush1.bf16.msra.mxu0 0
      %1425 = vmatprep.subr.bf16.mxu0 0
      %1426 = vmatpush1.bf16.msra.mxu0 0
      %1427 = vmatprep.subr.bf16.mxu0 0
      %1428 = vmatpush1.bf16.msra.mxu0 0
      %1429 = vmatprep.subr.bf16.mxu0 0
      %1430 = vmatpush1.bf16.msra.mxu0 0
      %1431 = vmatprep.subr.bf16.mxu0 0
      %1432 = vmatpush1.bf16.msra.mxu0 0
      %1433 = vmatprep.subr.bf16.mxu0 0
      %1434 = vmatpush1.bf16.msra.mxu0 0
      %1435 = vmatprep.mubr.bf16.mxu0 0
      %1436 = vmatmul.mubr.bf16.gmra.mrb[0].mxu0 %v1398
      %v1437 = vpop.f32.mrb[0].mxu0
      %v1438 = vadd.f32 0.0, %v1437
      %v1439 = vpop.f32.mrb[0].mxu0
      %v1440 = vpop.f32.mrb[0].mxu0
      %v1441 = vpop.f32.mrb[0].mxu0
      %1442 = vdwg.mxu0
      %1444 = vrot.lane.b32.xlu0 %v1342, 8
      %v1445 = vpop.permute.xlu0 %1444
      %1448 = vrot.lane.b32.xlu0 %v1390, 16
      %v1449 = vpop.permute.xlu0 %1448
      %1452 = vrot.lane.b32.xlu0 %v1438, 24
      %v1453 = vpop.permute.xlu0 %1452
      %v1455 = vsel %vm1008, %v1294, %v1445
      %vm1456 = vcmask 130048
      %v1457 = vsel %vm1456, %v1455, %v1449
      %vm1458 = vcmask 195584
      %v1459 = vsel %vm1458, %v1457, %v1453
      %v1460 = vpack.c.bf16 %v1459, %v1459
      %v1461 = vld [vmem:[%s826] sm:$0xf]
      %v1462 = vld [vmem:[%s826 + $0x4] sm:$0xf]
      %v1463 = vld [vmem:[%s826 + $0x8] sm:$0xf]
      %v1464 = vld [vmem:[%s826 + $0xc] sm:$0xf]
      %v1465 = vld [vmem:[%s829] sm:$0x1]
      %v1467 = vlaneseq
      %v1468 = vshrl.u32 %v1467, 7
      %v1469 = vsub.s32 0, %v1468
      %v1470 = vrot.slane %v1465, %v1469
      %v1476 = vunpack.c.l.b16 %v1461
      %v1477 = vunpack.c.l.b16 %v1462
      %v1478 = vunpack.c.l.b16 %v1463
      %v1479 = vunpack.c.l.b16 %v1464
      %v1480 = vpack.c.b16 %v1477, %v1476
      %v1481 = vpack.c.b16 %v1479, %v1478
      %v1485 = vsel %vm882, %v1460, 0
      %1487 = vmatprep.subr.bf16.mxu0 0
      %1488 = vmatpush1.bf16.msra.mxu0 %v1480
      %1489 = vmatprep.subr.bf16.mxu0 0
      %1490 = vmatpush1.bf16.msra.mxu0 %v1481
      %1491 = vmatprep.subr.bf16.mxu0 0
      %1492 = vmatpush1.bf16.msra.mxu0 0
      %1493 = vmatprep.subr.bf16.mxu0 0
      %1494 = vmatpush1.bf16.msra.mxu0 0
      %1495 = vmatprep.subr.bf16.mxu0 0
      %1496 = vmatpush1.bf16.msra.mxu0 0
      %1497 = vmatprep.subr.bf16.mxu0 0
      %1498 = vmatpush1.bf16.msra.mxu0 0
      %1499 = vmatprep.subr.bf16.mxu0 0
      %1500 = vmatpush1.bf16.msra.mxu0 0
      %1501 = vmatprep.subr.bf16.mxu0 0
      %1502 = vmatpush1.bf16.msra.mxu0 0
      %1503 = vmatprep.subr.bf16.mxu0 0
      %1504 = vmatpush1.bf16.msra.mxu0 0
      %1505 = vmatprep.subr.bf16.mxu0 0
      %1506 = vmatpush1.bf16.msra.mxu0 0
      %1507 = vmatprep.subr.bf16.mxu0 0
      %1508 = vmatpush1.bf16.msra.mxu0 0
      %1509 = vmatprep.subr.bf16.mxu0 0
      %1510 = vmatpush1.bf16.msra.mxu0 0
      %1511 = vmatprep.subr.bf16.mxu0 0
      %1512 = vmatpush1.bf16.msra.mxu0 0
      %1513 = vmatprep.subr.bf16.mxu0 0
      %1514 = vmatpush1.bf16.msra.mxu0 0
      %1515 = vmatprep.subr.bf16.mxu0 0
      %1516 = vmatpush1.bf16.msra.mxu0 0
      %1517 = vmatprep.subr.bf16.mxu0 0
      %1518 = vmatpush1.bf16.msra.mxu0 0
      %1519 = vmatprep.mubr.bf16.mxu0 0
      %1520 = vmatmul.mubr.bf16.gmra.mrb[0].mxu0 %v1485
      %v1521 = vpop.f32.mrb[0].mxu0
      %v1522 = vadd.f32 %v1470, %v1521
      %v1523 = vpop.f32.mrb[0].mxu0
      %v1524 = vpop.f32.mrb[0].mxu0
      %v1525 = vpop.f32.mrb[0].mxu0
      %1526 = vdwg.mxu0
      %v1527 = vadd.f32 %v1522, %v879
      %v1528 = vld [vmem:[%s838] sm:$0x1]
      %v1529 = vld [vmem:[%s841] sm:$0x1]
      %v1530 = vsel %vm882, %v1527, 0.0
      %1531 = vadd.xlane.f32.xlu0 %v1530
      %v1532 = vpop.xlane.xlu0 %1531
      %v1533 = vmul.f32 %v1532, %v886
      %v1534 = vsub.f32 %v1527, %v1533
      %v1535 = vmul.f32 %v1534, %v1534
      %v1536 = vsel %vm882, %v1535, 0.0
      %1537 = vadd.xlane.f32.xlu0 %v1536
      %v1538 = vpop.xlane.xlu0 %1537
      %v1539 = vmul.f32 %v1538, %v886
      %v1540 = vadd.f32 %v1539, 1e-06
      %v1541 = vrsqrt.pop %v1540
      %v1542 = vmul.f32 %v1534, %v1541
      %v1544 = vlaneseq
      %v1545 = vshrl.u32 %v1544, 7
      %v1546 = vsub.s32 0, %v1545
      %v1547 = vrot.slane %v1528, %v1546
      %v1549 = vmul.f32 %v1542, %v1547
      %v1551 = vlaneseq
      %v1552 = vshrl.u32 %v1551, 7
      %v1553 = vsub.s32 0, %v1552
      %v1554 = vrot.slane %v1529, %v1553
      %v1556 = vadd.f32 %v1549, %v1554
      %v1557 = vpack.c.bf16 %v1556, %v1556
      %v1558 = vld [vmem:[%s846] sm:$0xf]
      %v1559 = vld [vmem:[%s846 + $0x4] sm:$0xf]
      %v1560 = vld [vmem:[%s846 + $0x8] sm:$0xf]
      %v1561 = vld [vmem:[%s846 + $0xc] sm:$0xf]
      %v1562 = vld [vmem:[%s849] sm:$0x1]
      %v1564 = vlaneseq
      %v1565 = vshrl.u32 %v1564, 7
      %v1566 = vsub.s32 0, %v1565
      %v1567 = vrot.slane %v1562, %v1566
      %v1573 = vunpack.c.l.b16 %v1558
      %v1574 = vunpack.c.l.b16 %v1559
      %v1575 = vunpack.c.l.b16 %v1560
      %v1576 = vunpack.c.l.b16 %v1561
      %v1577 = vpack.c.b16 %v1574, %v1573
      %v1578 = vpack.c.b16 %v1576, %v1575
      %v1582 = vsel %vm882, %v1557, 0
      %1584 = vmatprep.subr.bf16.mxu0 0
      %1585 = vmatpush1.bf16.msra.mxu0 %v1577
      %1586 = vmatprep.subr.bf16.mxu0 0
      %1587 = vmatpush1.bf16.msra.mxu0 %v1578
      %1588 = vmatprep.subr.bf16.mxu0 0
      %1589 = vmatpush1.bf16.msra.mxu0 0
      %1590 = vmatprep.subr.bf16.mxu0 0
      %1591 = vmatpush1.bf16.msra.mxu0 0
      %1592 = vmatprep.subr.bf16.mxu0 0
      %1593 = vmatpush1.bf16.msra.mxu0 0
      %1594 = vmatprep.subr.bf16.mxu0 0
      %1595 = vmatpush1.bf16.msra.mxu0 0
      %1596 = vmatprep.subr.bf16.mxu0 0
      %1597 = vmatpush1.bf16.msra.mxu0 0
      %1598 = vmatprep.subr.bf16.mxu0 0
      %1599 = vmatpush1.bf16.msra.mxu0 0
      %1600 = vmatprep.subr.bf16.mxu0 0
      %1601 = vmatpush1.bf16.msra.mxu0 0
      %1602 = vmatprep.subr.bf16.mxu0 0
      %1603 = vmatpush1.bf16.msra.mxu0 0
      %1604 = vmatprep.subr.bf16.mxu0 0
      %1605 = vmatpush1.bf16.msra.mxu0 0
      %1606 = vmatprep.subr.bf16.mxu0 0
      %1607 = vmatpush1.bf16.msra.mxu0 0
      %1608 = vmatprep.subr.bf16.mxu0 0
      %1609 = vmatpush1.bf16.msra.mxu0 0
      %1610 = vmatprep.subr.bf16.mxu0 0
      %1611 = vmatpush1.bf16.msra.mxu0 0
      %1612 = vmatprep.subr.bf16.mxu0 0
      %1613 = vmatpush1.bf16.msra.mxu0 0
      %1614 = vmatprep.subr.bf16.mxu0 0
      %1615 = vmatpush1.bf16.msra.mxu0 0
      %1616 = vmatprep.mubr.bf16.mxu0 0
      %1617 = vmatmul.mubr.bf16.gmra.mrb[0].mxu0 %v1582
      %v1618 = vpop.f32.mrb[0].mxu0
      %v1619 = vadd.f32 %v1567, %v1618
      %v1620 = vpop.f32.mrb[0].mxu0
      %v1621 = vpop.f32.mrb[0].mxu0
      %v1622 = vpop.f32.mrb[0].mxu0
      %1623 = vdwg.mxu0
      %v1624 = vmul.f32 %v1619, 0.5
      %v1625 = vmul.f32 %v1619, 0.044715
      %v1626 = vmul.f32 %v1625, %v1619
      %v1627 = vmul.f32 %v1626, %v1619
      %v1628 = vadd.f32 %v1619, %v1627
      %v1629 = vmul.f32 %v1628, 0.7978846
      %v1630 = vtanh.pop %v1629
      %v1631 = vadd.f32 %v1630, 1.0
      %v1632 = vmul.f32 %v1624, %v1631
      %v1633 = vpack.c.bf16 %v1632, %v1632
      %v1634 = vld [vmem:[%s854] sm:$0xf]
      %v1635 = vld [vmem:[%s854 + $0x4] sm:$0xf]
      %v1636 = vld [vmem:[%s854 + $0x8] sm:$0xf]
      %v1637 = vld [vmem:[%s854 + $0xc] sm:$0xf]
      %v1638 = vld [vmem:[%s854 + $0x10] sm:$0xf]
      %v1639 = vld [vmem:[%s854 + $0x14] sm:$0xf]
      %v1640 = vld [vmem:[%s854 + $0x18] sm:$0xf]
      %v1641 = vld [vmem:[%s854 + $0x1c] sm:$0xf]
      %v1642 = vld [vmem:[%s857] sm:$0x1]
      %v1644 = vlaneseq
      %v1645 = vshrl.u32 %v1644, 7
      %v1646 = vsub.s32 0, %v1645
      %v1647 = vrot.slane %v1642, %v1646
      %v1657 = vunpack.c.l.b16 %v1634
      %v1658 = vunpack.c.l.b16 %v1635
      %v1659 = vunpack.c.l.b16 %v1636
      %v1660 = vunpack.c.l.b16 %v1637
      %v1661 = vunpack.c.l.b16 %v1638
      %v1662 = vunpack.c.l.b16 %v1639
      %v1663 = vunpack.c.l.b16 %v1640
      %v1664 = vunpack.c.l.b16 %v1641
      %v1665 = vpack.c.b16 %v1658, %v1657
      %v1666 = vpack.c.b16 %v1660, %v1659
      %v1667 = vpack.c.b16 %v1662, %v1661
      %v1668 = vpack.c.b16 %v1664, %v1663
      %vm1673 = vcmask 523264
      %v1675 = vsel %vm1673, %v1633, 0
      %1677 = vmatprep.subr.bf16.mxu0 0
      %1678 = vmatpush1.bf16.msra.mxu0 %v1665
      %1679 = vmatprep.subr.bf16.mxu0 0
      %1680 = vmatpush1.bf16.msra.mxu0 %v1666
      %1681 = vmatprep.subr.bf16.mxu0 0
      %1682 = vmatpush1.bf16.msra.mxu0 %v1667
      %1683 = vmatprep.subr.bf16.mxu0 0
      %1684 = vmatpush1.bf16.msra.mxu0 %v1668
      %1685 = vmatprep.subr.bf16.mxu0 0
      %1686 = vmatpush1.bf16.msra.mxu0 0
      %1687 = vmatprep.subr.bf16.mxu0 0
      %1688 = vmatpush1.bf16.msra.mxu0 0
      %1689 = vmatprep.subr.bf16.mxu0 0
      %1690 = vmatpush1.bf16.msra.mxu0 0
      %1691 = vmatprep.subr.bf16.mxu0 0
      %1692 = vmatpush1.bf16.msra.mxu0 0
      %1693 = vmatprep.subr.bf16.mxu0 0
      %1694 = vmatpush1.bf16.msra.mxu0 0
      %1695 = vmatprep.subr.bf16.mxu0 0
      %1696 = vmatpush1.bf16.msra.mxu0 0
      %1697 = vmatprep.subr.bf16.mxu0 0
      %1698 = vmatpush1.bf16.msra.mxu0 0
      %1699 = vmatprep.subr.bf16.mxu0 0
      %1700 = vmatpush1.bf16.msra.mxu0 0
      %1701 = vmatprep.subr.bf16.mxu0 0
      %1702 = vmatpush1.bf16.msra.mxu0 0
      %1703 = vmatprep.subr.bf16.mxu0 0
      %1704 = vmatpush1.bf16.msra.mxu0 0
      %1705 = vmatprep.subr.bf16.mxu0 0
      %1706 = vmatpush1.bf16.msra.mxu0 0
      %1707 = vmatprep.subr.bf16.mxu0 0
      %1708 = vmatpush1.bf16.msra.mxu0 0
      %1709 = vmatprep.mubr.bf16.mxu0 0
      %1710 = vmatmul.mubr.bf16.gmra.mrb[0].mxu0 %v1675
      %v1711 = vpop.f32.mrb[0].mxu0
      %v1712 = vadd.f32 %v1647, %v1711
      %v1713 = vpop.f32.mrb[0].mxu0
      %v1714 = vpop.f32.mrb[0].mxu0
      %v1715 = vpop.f32.mrb[0].mxu0
      %1716 = vdwg.mxu0
      %v1717 = vadd.f32 %v1712, %v1527
      %1718 = vst.msk [vmem:[#allocation2] sm:$0xff] %vm882, %v1717
      %p1719 = scmp.eq.s32.totalorder %s38, 1
      // Predicated region
      $region105: #{tpu_custom_call.1} parent=99 // pred_check
        %p1720 = pneg %p1719
      $region106: #{tpu_custom_call.1} parent=99 // pred_check_branch
        %1722 = sbr.rel (%p1720) target = $region108
      $region107: #{tpu_custom_call.1} parent=99 // pred_region
        %v1723 = vld [vmem:[%s16] sm:$0x1]
        %v1724 = vld [vmem:[%s17] sm:$0x1]
        %v1725 = vsel %vm882, %v1717, 0.0
        %1726 = vadd.xlane.f32.xlu0 %v1725
        %v1727 = vpop.xlane.xlu0 %1726
        %v1728 = vmul.f32 %v1727, %v886
        %v1729 = vsub.f32 %v1717, %v1728
        %v1730 = vmul.f32 %v1729, %v1729
        %v1731 = vsel %vm882, %v1730, 0.0
        %1732 = vadd.xlane.f32.xlu0 %v1731
        %v1733 = vpop.xlane.xlu0 %1732
        %v1734 = vmul.f32 %v1733, %v886
        %v1735 = vadd.f32 %v1734, 1e-06
        %v1736 = vrsqrt.pop %v1735
        %v1737 = vmul.f32 %v1729, %v1736
        %v1739 = vlaneseq
        %v1740 = vshrl.u32 %v1739, 7
        %v1741 = vsub.s32 0, %v1740
        %v1742 = vrot.slane %v1723, %v1741
        %v1744 = vmul.f32 %v1737, %v1742
        %v1746 = vlaneseq
        %v1747 = vshrl.u32 %v1746, 7
        %v1748 = vsub.s32 0, %v1747
        %v1749 = vrot.slane %v1724, %v1748
        %v1751 = vadd.f32 %v1744, %v1749
        %v1752 = vld [vmem:[%s18] sm:$0xff]
        %v1753 = vld [vmem:[%s18 + $0x8] sm:$0xff]
        %v1754 = vld [vmem:[%s18 + $0x10] sm:$0xff]
        %v1755 = vld [vmem:[%s18 + $0x18] sm:$0xff]
        %v1756 = vld [vmem:[#allocation3] sm:$0x1]
        %v1758 = vlaneseq
        %v1759 = vshrl.u32 %v1758, 7
        %v1760 = vsub.s32 0, %v1759
        %v1761 = vrot.slane %v1756, %v1760
        %v1764 = vsel %vm882, %v1751, 0
        %1766 = vmatprep.subr.mxu0 0.0
        %1767 = vmatpush1.msra.mxu0 %v1752
        %1768 = vmatprep.subr.mxu0 0.0
        %1769 = vmatpush1.msra.mxu0 %v1753
        %1770 = vmatprep.subr.mxu0 0.0
        %1771 = vmatpush1.msra.mxu0 %v1754
        %1772 = vmatprep.subr.mxu0 0.0
        %1773 = vmatpush1.msra.mxu0 %v1755
        %1774 = vmatprep.subr.mxu0 0.0
        %1775 = vmatpush1.msra.mxu0 0.0
        %1776 = vmatprep.subr.mxu0 0.0
        %1777 = vmatpush1.msra.mxu0 0.0
        %1778 = vmatprep.subr.mxu0 0.0
        %1779 = vmatpush1.msra.mxu0 0.0
        %1780 = vmatprep.subr.mxu0 0.0
        %1781 = vmatpush1.msra.mxu0 0.0
        %1782 = vmatprep.subr.mxu0 0.0
        %1783 = vmatpush1.msra.mxu0 0.0
        %1784 = vmatprep.subr.mxu0 0.0
        %1785 = vmatpush1.msra.mxu0 0.0
        %1786 = vmatprep.subr.mxu0 0.0
        %1787 = vmatpush1.msra.mxu0 0.0
        %1788 = vmatprep.subr.mxu0 0.0
        %1789 = vmatpush1.msra.mxu0 0.0
        %1790 = vmatprep.subr.mxu0 0.0
        %1791 = vmatpush1.msra.mxu0 0.0
        %1792 = vmatprep.subr.mxu0 0.0
        %1793 = vmatpush1.msra.mxu0 0.0
        %1794 = vmatprep.subr.mxu0 0.0
        %1795 = vmatpush1.msra.mxu0 0.0
        %1796 = vmatprep.subr.mxu0 0.0
        %1797 = vmatpush1.msra.mxu0 0.0
        %1798 = vmatprep.subr.mxu0 0.0
        %1799 = vmatpush1.msra.mxu0 0.0
        %1800 = vmatprep.subr.mxu0 0.0
        %1801 = vmatpush1.msra.mxu0 0.0
        %1802 = vmatprep.subr.mxu0 0.0
        %1803 = vmatpush1.msra.mxu0 0.0
        %1804 = vmatprep.subr.mxu0 0.0
        %1805 = vmatpush1.msra.mxu0 0.0
        %1806 = vmatprep.subr.mxu0 0.0
        %1807 = vmatpush1.msra.mxu0 0.0
        %1808 = vmatprep.subr.mxu0 0.0
        %1809 = vmatpush1.msra.mxu0 0.0
        %1810 = vmatprep.subr.mxu0 0.0
        %1811 = vmatpush1.msra.mxu0 0.0
        %1812 = vmatprep.subr.mxu0 0.0
        %1813 = vmatpush1.msra.mxu0 0.0
        %1814 = vmatprep.subr.mxu0 0.0
        %1815 = vmatpush1.msra.mxu0 0.0
        %1816 = vmatprep.subr.mxu0 0.0
        %1817 = vmatpush1.msra.mxu0 0.0
        %1818 = vmatprep.subr.mxu0 0.0
        %1819 = vmatpush1.msra.mxu0 0.0
        %1820 = vmatprep.subr.mxu0 0.0
        %1821 = vmatpush1.msra.mxu0 0.0
        %1822 = vmatprep.subr.mxu0 0.0
        %1823 = vmatpush1.msra.mxu0 0.0
        %1824 = vmatprep.subr.mxu0 0.0
        %1825 = vmatpush1.msra.mxu0 0.0
        %1826 = vmatprep.subr.mxu0 0.0
        %1827 = vmatpush1.msra.mxu0 0.0
        %1828 = vmatprep.subr.mxu0 0.0
        %1829 = vmatpush1.msra.mxu0 0.0
        %1830 = vmatprep.mubr.f32.mxu0 0.0
        %1831 = vmatmul.mubr.f32.gmra.mrb[0].mxu0 %v1764
        %v1832 = vpop.f32.mrb[0].mxu0
        %v1833 = vadd.f32 %v1761, %v1832
        %v1834 = vpop.f32.mrb[0].mxu0
        %1835 = vdwg.mxu0
        %v1836 = vxor.u32 %v1833, 2147483648
        %v1837 = vmul.f32 %v1836, 1.442695
        %v1838 = vpow.pop %v1837
        %v1839 = vadd.f32 %v1838, 1.0
        %v1840 = vrcp.pop %v1839
        %v1841 = vmul.f32 1.0, %v1840
        %v1842 = vld [vmem:[%s810] sm:$0xff]
        %v1843 = vmul.f32 %v1841, %v1842
        %vm1844 = vcmask 7168
        %1845 = vst.msk [vmem:[%s861] sm:$0xff] %vm1844, %v1843
      $region108: #{tpu_custom_call.1} parent=99 // pred_fallthru
        _
      %p1846 = scmp.lt.s32.totalorder %s37, 1
      %s1847 = scalar_select %p1846, %s37, 1
      %s1848 = smul.addr %s1847, 8
      %s1849 = scalar_lea.vmem %s20, %s1848
      // Predicated region
      $region109: #{tpu_custom_call.1} parent=99 // pred_check
        %p1850 = pneg %p558
      $region110: #{tpu_custom_call.1} parent=99 // pred_check_branch
        %1852 = sbr.rel (%p1850) target = $region112
      $region111: #{tpu_custom_call.1} parent=99 // pred_region
        _
      $region112: #{tpu_custom_call.1} parent=99 // pred_fallthru
        _
    $region100: #{tpu_custom_call.1} parent=5 // pred_fallthru
      _
    %p1853 = scmp.le.s32.totalorder 2, %s28
    // Predicated region
    $region113: #{tpu_custom_call.1} parent=5 // pred_check
      %p1854 = pneg %p1853
    $region114: #{tpu_custom_call.1} parent=5 // pred_check_branch
      %1856 = sbr.rel (%p1854) target = $region116
    $region115: #{tpu_custom_call.1} parent=5 // pred_region
      %s1857 = ssub.s32 %s28, 2
      // Predicated region
      $region117: #{tpu_custom_call.1} parent=115 // pred_check
        %p1858 = pneg %p564
      $region118: #{tpu_custom_call.1} parent=115 // pred_check_branch
        %1860 = sbr.rel (%p1858) target = $region120
      $region119: #{tpu_custom_call.1} parent=115 // pred_region
        %p1861 = scmp.lt.s32.totalorder %s39, 1
        %s1862 = scalar_select %p1861, %s39, 1
        %s1863 = smul.addr %s1862, 8
        %s1864 = scalar_lea.vmem %s20, %s1863
      $region120: #{tpu_custom_call.1} parent=115 // pred_fallthru
        _
    $region116: #{tpu_custom_call.1} parent=5 // pred_fallthru
      _
  $region6: #{tpu_custom_call.1} parent=0 // loop_footer
    %s32 = sadd.s32 1, %s28
  $region7: #{tpu_custom_call.1} parent=0 // loop_footer_branch
    %27 = sbr.rel target = $region3
  $region8: #{tpu_custom_call.1} parent=0 // loop_exit
    _

</llo_original>
